<compile_context>
chip_gen: v5e
topology: v5e:2x2
jax: 0.10.0
libtpu: 0.0.40
codegen_flags: <defaults>
</compile_context>

<pallas_src>
import math
import jax
import jax.numpy as jnp
from jax.experimental import pallas as pl
from jax.experimental.pallas import tpu as pltpu


def make_streaming_layer_kernel(d_model, nhead, T, S, Bt, eps):
    head_dim = d_model // nhead

    def layer_norm(v, w, b):
        mu = jnp.mean(v, axis=-1, keepdims=True)
        var = jnp.mean(jnp.square(v - mu), axis=-1, keepdims=True)
        return (v - mu) * jax.lax.rsqrt(var + eps) * w + b

    def mm(a_f32, w_ref, b_ref):
        # bf16 MXU operands, f32 accumulation, f32 bias add.
        return jnp.dot(a_f32.astype(jnp.bfloat16), w_ref[...],
                       preferred_element_type=jnp.float32) + b_ref[...]

    def kernel(ck_ref, cv_ref,
               wq_ref, bq_ref, wk_ref, bk_ref, wv_ref, bv_ref,
               wo_ref, bo_ref, n1w_ref, n1b_ref,
               w1_ref, b1_ref, w2_ref, b2_ref, n2w_ref, n2b_ref,
               o_ref):
        D = d_model
        ck3 = ck_ref[...]                             # (Bt, S, D) f32
        cv3 = cv_ref[...]                             # (Bt, S, D) f32
        # queries are the newest T rows of the concatenated key cache
        x = ck3[:, S - T:, :].reshape(Bt * T, D)      # (Bt*T, D)
        ck = ck3.reshape(Bt * S, D)                   # (Bt*S, D)
        cv = cv3.reshape(Bt * S, D)                   # (Bt*S, D)

        # ---- in-projections (weights pre-transposed; scale folded into Wq/bq)
        q = mm(x, wq_ref, bq_ref)                     # (Bt*T, D)
        k = mm(ck, wk_ref, bk_ref)                    # (Bt*S, D)
        v = mm(cv, wv_ref, bv_ref)                    # (Bt*S, D)

        # ---- per-head attention: static lane slices, no head transposes ----
        ctx_heads = []
        for h in range(nhead):
            sl = slice(h * head_dim, (h + 1) * head_dim)
            qh = q[:, sl].reshape(Bt, T, head_dim)
            kh = k[:, sl].reshape(Bt, S, head_dim)
            vh = v[:, sl].reshape(Bt, S, head_dim)
            s = jnp.einsum('btd,bsd->bts',
                           qh.astype(jnp.bfloat16), kh.astype(jnp.bfloat16),
                           preferred_element_type=jnp.float32)       # (Bt,T,S)
            s = s - jnp.max(s, axis=-1, keepdims=True)
            p = jnp.exp(s)
            p = p * pl.reciprocal(jnp.sum(p, axis=-1, keepdims=True),
                                  approx=True)
            ctx_heads.append(
                jnp.einsum('bts,bsd->btd',
                           p.astype(jnp.bfloat16), vh.astype(jnp.bfloat16),
                           preferred_element_type=jnp.float32))       # (Bt,T,Dh)
        ctx = jnp.concatenate(ctx_heads, axis=-1).reshape(Bt * T, D)

        attn = mm(ctx, wo_ref, bo_ref)                # out-projection (Bt*T, D)

        # ---- residual + norm1 (post-norm) ----
        y = layer_norm(attn + x, n1w_ref[...], n1b_ref[...])

        # ---- feed-forward ----
        h1 = jnp.maximum(mm(y, w1_ref, b1_ref), 0.0)  # ReLU
        f = mm(h1, w2_ref, b2_ref)

        # ---- residual + norm2 ----
        o_ref[...] = layer_norm(f + y, n2w_ref[...], n2b_ref[...]).reshape(Bt, T, D)

    return kernel


def streaming_transformer_encoder_layer(x, past_key, past_value, params, *,
                                         nhead, eps=1e-5, block_b=8):
    """x: (B, T, D) with T==1 in streaming mode; past_key/value: (B, L, D) or None.

    Returns (output (B,T,D), new_key (B,L+T,D), new_value (B,L+T,D))."""
    B, T, D = x.shape
    if past_key is not None and past_value is not None:
        new_key = jnp.concatenate([past_key, x], axis=1)
        new_value = jnp.concatenate([past_value, x], axis=1)
    else:
        new_key, new_value = x, x
    S = new_key.shape[1]
    F = params['linear1_w'].shape[0]
    head_dim = D // nhead
    scale = 1.0 / math.sqrt(head_dim)

    # -- batch blocking (pad B up to a multiple of Bt) --
    Bt = min(block_b, B)
    Bp = ((B + Bt - 1) // Bt) * Bt

    def pad_b(a):
        return a if Bp == B else jnp.pad(a, ((0, Bp - B), (0, 0), (0, 0)))

    ckp, cvp = pad_b(new_key), pad_b(new_value)

    # -- weight prep: pre-transposed, bf16 for MXU operands, scale folded into Wq
    ipw = params['in_proj_w'].astype(jnp.float32)     # (3D, D)
    ipb = params['in_proj_b'].astype(jnp.float32)     # (3D,)
    wq = (ipw[0:D] * scale).T.astype(jnp.bfloat16)            # (D, D)
    wk = ipw[D:2 * D].T.astype(jnp.bfloat16)                  # (D, D)
    wv = ipw[2 * D:3 * D].T.astype(jnp.bfloat16)              # (D, D)
    bq = (ipb[0:D] * scale).reshape(1, D)
    bk = ipb[D:2 * D].reshape(1, D)
    bv = ipb[2 * D:3 * D].reshape(1, D)
    wo = params['out_proj_w'].T.astype(jnp.bfloat16)          # (D, D)
    bo = params['out_proj_b'].reshape(1, D).astype(jnp.float32)
    w1 = params['linear1_w'].T.astype(jnp.bfloat16)           # (D, F)
    b1 = params['linear1_b'].reshape(1, F).astype(jnp.float32)
    w2 = params['linear2_w'].T.astype(jnp.bfloat16)           # (F, D)
    b2 = params['linear2_b'].reshape(1, D).astype(jnp.float32)
    n1w = params['norm1_w'].reshape(1, D).astype(jnp.float32)
    n1b = params['norm1_b'].reshape(1, D).astype(jnp.float32)
    n2w = params['norm2_w'].reshape(1, D).astype(jnp.float32)
    n2b = params['norm2_b'].reshape(1, D).astype(jnp.float32)

    weights = [wq, bq, wk, bk, wv, bv, wo, bo, n1w, n1b,
               w1, b1, w2, b2, n2w, n2b]

    kernel = make_streaming_layer_kernel(D, nhead, T, S, Bt, eps)

    def batch_spec(shape):
        return pl.BlockSpec(shape, lambda b: (b, 0, 0))

    def weight_spec(shape):
        nd = len(shape)
        return pl.BlockSpec(shape, lambda b: (0,) * nd)

    in_specs = [batch_spec((Bt, S, D)),
                batch_spec((Bt, S, D))]
    in_specs += [weight_spec(w.shape) for w in weights]

    # -- cost estimate for the XLA scheduler --
    flops = (2 * Bp * T * D * D            # q proj
             + 4 * Bp * S * D * D          # k, v proj
             + 4 * Bp * nhead * T * S * head_dim   # scores + ctx
             + 2 * Bp * T * D * D          # out proj
             + 4 * Bp * T * D * F)         # FFN
    transcendentals = Bp * nhead * T * S + 2 * Bp * T
    wbytes = sum(int(w.size) * w.dtype.itemsize for w in weights)
    bytes_accessed = (ckp.size + cvp.size + Bp * T * D) * 4 + wbytes

    # -- VMEM budget: double-buffered weights + a few activation copies --
    abytes = (Bt * T * D + 2 * Bt * S * D) * 4
    vmem_limit = int(min(100 * 1024 * 1024,
                         max(32 * 1024 * 1024,
                             2 * wbytes + 16 * abytes + (4 << 20))))

    out = pl.pallas_call(
        kernel,
        out_shape=jax.ShapeDtypeStruct((Bp, T, D), jnp.float32),
        grid=(Bp // Bt,),
        in_specs=in_specs,
        out_specs=batch_spec((Bt, T, D)),
        compiler_params=pltpu.CompilerParams(
            dimension_semantics=("parallel",),
            vmem_limit_bytes=vmem_limit),
        cost_estimate=pl.CostEstimate(flops=flops,
                                      transcendentals=transcendentals,
                                      bytes_accessed=bytes_accessed),
    )(ckp, cvp, *weights)

    return out[:B], new_key, new_value


def init_params(key, d_model, nhead, dim_feedforward):
    ks = jax.random.split(key, 8)
    s = 0.05
    return {
        'in_proj_w': jax.random.normal(ks[0], (3 * d_model, d_model), jnp.float32) * s,
        'in_proj_b': jax.random.normal(ks[1], (3 * d_model,), jnp.float32) * s,
        'out_proj_w': jax.random.normal(ks[2], (d_model, d_model), jnp.float32) * s,
        'out_proj_b': jax.random.normal(ks[3], (d_model,), jnp.float32) * s,
        'norm1_w': jnp.ones((d_model,), jnp.float32),
        'norm1_b': jnp.zeros((d_model,), jnp.float32),
        'linear1_w': jax.random.normal(ks[4], (dim_feedforward, d_model), jnp.float32) * s,
        'linear1_b': jax.random.normal(ks[5], (dim_feedforward,), jnp.float32) * s,
        'linear2_w': jax.random.normal(ks[6], (d_model, dim_feedforward), jnp.float32) * s,
        'linear2_b': jax.random.normal(ks[7], (d_model,), jnp.float32) * s,
        'norm2_w': jnp.ones((d_model,), jnp.float32),
        'norm2_b': jnp.zeros((d_model,), jnp.float32),
    }


def reference_layer(x, past_k, past_v, params, nhead, eps=1e-5):
    """Pure-JAX f32 reference (matches PyTorch StreamingTransformerEncoderLayer)."""
    B, T, D = x.shape
    H, Dh = nhead, D // nhead
    ck = jnp.concatenate([past_k, x], axis=1)
    cv = jnp.concatenate([past_v, x], axis=1)
    S = ck.shape[1]
    Wq, Wk, Wv = jnp.split(params['in_proj_w'], 3, axis=0)
    bq, bk, bv = jnp.split(params['in_proj_b'], 3)
    q = x @ Wq.T + bq
    k = ck @ Wk.T + bk
    v = cv @ Wv.T + bv
    qh = q.reshape(B, T, H, Dh).transpose(0, 2, 1, 3)
    kh = k.reshape(B, S, H, Dh).transpose(0, 2, 1, 3)
    vh = v.reshape(B, S, H, Dh).transpose(0, 2, 1, 3)
    s = jnp.einsum('bhtd,bhsd->bhts', qh, kh) / math.sqrt(Dh)
    p = jax.nn.softmax(s, axis=-1)
    ctx = jnp.einsum('bhts,bhsd->bhtd', p, vh).transpose(0, 2, 1, 3).reshape(B, T, D)
    attn = ctx @ params['out_proj_w'].T + params['out_proj_b']

    def ln(u, w, b):
        mu = u.mean(-1, keepdims=True)
        var = ((u - mu) ** 2).mean(-1, keepdims=True)
        return (u - mu) / jnp.sqrt(var + eps) * w + b

    y = ln(attn + x, params['norm1_w'], params['norm1_b'])
    h = jax.nn.relu(y @ params['linear1_w'].T + params['linear1_b'])
    f = h @ params['linear2_w'].T + params['linear2_b']
    return ln(f + y, params['norm2_w'], params['norm2_b']), ck, cv


if __name__ == "__main__":
    key = jax.random.PRNGKey(0)
    B, T, L, D, H, FF = 2, 1, 7, 32, 4, 64    # streaming: 1 new token, 7 cached

    k_x, k_pk, k_pv, k_p = jax.random.split(key, 4)
    x = jax.random.normal(k_x, (B, T, D), jnp.float32)
    past_k = jax.random.normal(k_pk, (B, L, D), jnp.float32)
    past_v = jax.random.normal(k_pv, (B, L, D), jnp.float32)
    params = init_params(k_p, D, H, FF)

    out, new_k, new_v = streaming_transformer_encoder_layer(
        x, past_k, past_v, params, nhead=H)
    out = jax.block_until_ready(out)

    assert out.shape == (B, T, D)
    assert new_k.shape == (B, L + T, D) and new_v.shape == (B, L + T, D)
    assert bool(jnp.all(jnp.isfinite(out)))

    ref_out, ref_k, ref_v = reference_layer(x, past_k, past_v, params, H)
    err = float(jnp.max(jnp.abs(out - ref_out)))
    assert err < 5e-2, f"mismatch vs reference: {err}"
    assert bool(jnp.all(new_k == ref_k)) and bool(jnp.all(new_v == ref_v))

    print("KERNEL_OK")
</pallas_src>

<mosaic_0001>
module attributes {stable_mosaic.version = 11 : i64} {
  func.func @kernel(%arg0: i32, %arg1: memref<2x8x32xf32, #tpu.memory_space<vmem>>, %arg2: memref<2x8x32xf32, #tpu.memory_space<vmem>>, %arg3: memref<32x32xbf16, #tpu.memory_space<vmem>>, %arg4: memref<1x32xf32, #tpu.memory_space<vmem>>, %arg5: memref<32x32xbf16, #tpu.memory_space<vmem>>, %arg6: memref<1x32xf32, #tpu.memory_space<vmem>>, %arg7: memref<32x32xbf16, #tpu.memory_space<vmem>>, %arg8: memref<1x32xf32, #tpu.memory_space<vmem>>, %arg9: memref<32x32xbf16, #tpu.memory_space<vmem>>, %arg10: memref<1x32xf32, #tpu.memory_space<vmem>>, %arg11: memref<1x32xf32, #tpu.memory_space<vmem>>, %arg12: memref<1x32xf32, #tpu.memory_space<vmem>>, %arg13: memref<32x64xbf16, #tpu.memory_space<vmem>>, %arg14: memref<1x64xf32, #tpu.memory_space<vmem>>, %arg15: memref<64x32xbf16, #tpu.memory_space<vmem>>, %arg16: memref<1x32xf32, #tpu.memory_space<vmem>>, %arg17: memref<1x32xf32, #tpu.memory_space<vmem>>, %arg18: memref<1x32xf32, #tpu.memory_space<vmem>>, %arg19: memref<2x1x32xf32, #tpu.memory_space<vmem>>) attributes {dimension_semantics = [#tpu.dimension_semantics<parallel>], iteration_bounds = array<i64: 1>, scalar_prefetch = 0 : i64, scratch_operands = 0 : i64, tpu.core_type = #tpu.core_type<tc>, window_params = [{transform_indices = @transform_0, window_bounds = array<i64: 2, 8, 32>}, {transform_indices = @transform_1, window_bounds = array<i64: 2, 8, 32>}, {pipeline_mode = #tpu.pipeline_mode<synchronous>, transform_indices = @transform_2, window_bounds = array<i64: 32, 32>}, {pipeline_mode = #tpu.pipeline_mode<synchronous>, transform_indices = @transform_3, window_bounds = array<i64: 1, 32>}, {pipeline_mode = #tpu.pipeline_mode<synchronous>, transform_indices = @transform_4, window_bounds = array<i64: 32, 32>}, {pipeline_mode = #tpu.pipeline_mode<synchronous>, transform_indices = @transform_5, window_bounds = array<i64: 1, 32>}, {pipeline_mode = #tpu.pipeline_mode<synchronous>, transform_indices = @transform_6, window_bounds = array<i64: 32, 32>}, {pipeline_mode = #tpu.pipeline_mode<synchronous>, transform_indices = @transform_7, window_bounds = array<i64: 1, 32>}, {pipeline_mode = #tpu.pipeline_mode<synchronous>, transform_indices = @transform_8, window_bounds = array<i64: 32, 32>}, {pipeline_mode = #tpu.pipeline_mode<synchronous>, transform_indices = @transform_9, window_bounds = array<i64: 1, 32>}, {pipeline_mode = #tpu.pipeline_mode<synchronous>, transform_indices = @transform_10, window_bounds = array<i64: 1, 32>}, {pipeline_mode = #tpu.pipeline_mode<synchronous>, transform_indices = @transform_11, window_bounds = array<i64: 1, 32>}, {pipeline_mode = #tpu.pipeline_mode<synchronous>, transform_indices = @transform_12, window_bounds = array<i64: 32, 64>}, {pipeline_mode = #tpu.pipeline_mode<synchronous>, transform_indices = @transform_13, window_bounds = array<i64: 1, 64>}, {pipeline_mode = #tpu.pipeline_mode<synchronous>, transform_indices = @transform_14, window_bounds = array<i64: 64, 32>}, {pipeline_mode = #tpu.pipeline_mode<synchronous>, transform_indices = @transform_15, window_bounds = array<i64: 1, 32>}, {pipeline_mode = #tpu.pipeline_mode<synchronous>, transform_indices = @transform_16, window_bounds = array<i64: 1, 32>}, {pipeline_mode = #tpu.pipeline_mode<synchronous>, transform_indices = @transform_17, window_bounds = array<i64: 1, 32>}, {transform_indices = @transform_18, window_bounds = array<i64: 2, 1, 32>}]} {
    %c0 = arith.constant 0 : index
    %c0_0 = arith.constant 0 : index
    %c0_1 = arith.constant 0 : index
    %0 = vector.load %arg1[%c0, %c0_0, %c0_1] : memref<2x8x32xf32, #tpu.memory_space<vmem>>, vector<2x8x32xf32>
    %c0_2 = arith.constant 0 : index
    %c0_3 = arith.constant 0 : index
    %c0_4 = arith.constant 0 : index
    %1 = vector.load %arg2[%c0_2, %c0_3, %c0_4] : memref<2x8x32xf32, #tpu.memory_space<vmem>>, vector<2x8x32xf32>
    %2 = vector.extract_strided_slice %0 {offsets = [0, 7, 0], sizes = [2, 1, 32], strides = [1, 1, 1]} : vector<2x8x32xf32> to vector<2x1x32xf32>
    %3 = vector.shape_cast %2 : vector<2x1x32xf32> to vector<2x32xf32>
    %4 = vector.shape_cast %0 : vector<2x8x32xf32> to vector<16x32xf32>
    %5 = vector.shape_cast %1 : vector<2x8x32xf32> to vector<16x32xf32>
    %6 = arith.truncf %3 : vector<2x32xf32> to vector<2x32xbf16>
    %c0_5 = arith.constant 0 : index
    %c0_6 = arith.constant 0 : index
    %7 = vector.load %arg3[%c0_5, %c0_6] : memref<32x32xbf16, #tpu.memory_space<vmem>>, vector<32x32xbf16>
    %cst = arith.constant dense<0.000000e+00> : vector<2x32xf32>
    %8 = tpu.matmul %6, %7, %cst {dimension_numbers = #tpu.dot_dimension_numbers<[1], [0], [0], [1], [0, 0, 1, 1], [], []>} : vector<2x32xbf16>, vector<32x32xbf16>, vector<2x32xf32> -> vector<2x32xf32>
    %c0_7 = arith.constant 0 : index
    %c0_8 = arith.constant 0 : index
    %9 = vector.load %arg4[%c0_7, %c0_8] : memref<1x32xf32, #tpu.memory_space<vmem>>, vector<1x32xf32>
    %10 = vector.broadcast %9 : vector<1x32xf32> to vector<2x32xf32>
    %11 = arith.addf %8, %10 : vector<2x32xf32>
    %12 = arith.truncf %4 : vector<16x32xf32> to vector<16x32xbf16>
    %c0_9 = arith.constant 0 : index
    %c0_10 = arith.constant 0 : index
    %13 = vector.load %arg5[%c0_9, %c0_10] : memref<32x32xbf16, #tpu.memory_space<vmem>>, vector<32x32xbf16>
    %cst_11 = arith.constant dense<0.000000e+00> : vector<16x32xf32>
    %14 = tpu.matmul %12, %13, %cst_11 {dimension_numbers = #tpu.dot_dimension_numbers<[1], [0], [0], [1], [0, 0, 1, 1], [], []>} : vector<16x32xbf16>, vector<32x32xbf16>, vector<16x32xf32> -> vector<16x32xf32>
    %c0_12 = arith.constant 0 : index
    %c0_13 = arith.constant 0 : index
    %15 = vector.load %arg6[%c0_12, %c0_13] : memref<1x32xf32, #tpu.memory_space<vmem>>, vector<1x32xf32>
    %16 = vector.broadcast %15 : vector<1x32xf32> to vector<16x32xf32>
    %17 = arith.addf %14, %16 : vector<16x32xf32>
    %18 = arith.truncf %5 : vector<16x32xf32> to vector<16x32xbf16>
    %c0_14 = arith.constant 0 : index
    %c0_15 = arith.constant 0 : index
    %19 = vector.load %arg7[%c0_14, %c0_15] : memref<32x32xbf16, #tpu.memory_space<vmem>>, vector<32x32xbf16>
    %cst_16 = arith.constant dense<0.000000e+00> : vector<16x32xf32>
    %20 = tpu.matmul %18, %19, %cst_16 {dimension_numbers = #tpu.dot_dimension_numbers<[1], [0], [0], [1], [0, 0, 1, 1], [], []>} : vector<16x32xbf16>, vector<32x32xbf16>, vector<16x32xf32> -> vector<16x32xf32>
    %c0_17 = arith.constant 0 : index
    %c0_18 = arith.constant 0 : index
    %21 = vector.load %arg8[%c0_17, %c0_18] : memref<1x32xf32, #tpu.memory_space<vmem>>, vector<1x32xf32>
    %22 = vector.broadcast %21 : vector<1x32xf32> to vector<16x32xf32>
    %23 = arith.addf %20, %22 : vector<16x32xf32>
    %24 = vector.extract_strided_slice %11 {offsets = [0, 0], sizes = [2, 8], strides = [1, 1]} : vector<2x32xf32> to vector<2x8xf32>
    %25 = vector.shape_cast %24 : vector<2x8xf32> to vector<2x1x8xf32>
    %26 = vector.extract_strided_slice %17 {offsets = [0, 0], sizes = [16, 8], strides = [1, 1]} : vector<16x32xf32> to vector<16x8xf32>
    %27 = vector.shape_cast %26 : vector<16x8xf32> to vector<2x8x8xf32>
    %28 = vector.extract_strided_slice %23 {offsets = [0, 0], sizes = [16, 8], strides = [1, 1]} : vector<16x32xf32> to vector<16x8xf32>
    %29 = vector.shape_cast %28 : vector<16x8xf32> to vector<2x8x8xf32>
    %30 = arith.truncf %25 : vector<2x1x8xf32> to vector<2x1x8xbf16>
    %31 = arith.truncf %27 : vector<2x8x8xf32> to vector<2x8x8xbf16>
    "tpu.trace_start"() <{level = 10 : i32, message = "btd,bsd->bts"}> : () -> ()
    %cst_19 = arith.constant dense<0.000000e+00> : vector<2x1x8xf32>
    %32 = tpu.matmul %30, %31, %cst_19 {dimension_numbers = #tpu.dot_dimension_numbers<[2], [2], [1], [1], [0, 0, 0, 1, 1, 1], [0], [0]>} : vector<2x1x8xbf16>, vector<2x8x8xbf16>, vector<2x1x8xf32> -> vector<2x1x8xf32>
    "tpu.trace_stop"() : () -> ()
    %cst_20 = arith.constant dense<0xFF800000> : vector<2x1xf32>
    %33 = vector.multi_reduction <maximumf>, %32, %cst_20 [2] : vector<2x1x8xf32> to vector<2x1xf32>
    %34 = vector.shape_cast %33 : vector<2x1xf32> to vector<2x1x1xf32>
    %35 = vector.broadcast %34 : vector<2x1x1xf32> to vector<2x1x8xf32>
    %36 = arith.subf %32, %35 : vector<2x1x8xf32>
    %37 = math.exp %36 : vector<2x1x8xf32>
    %cst_21 = arith.constant dense<0.000000e+00> : vector<2x1xf32>
    %38 = vector.multi_reduction <add>, %37, %cst_21 [2] : vector<2x1x8xf32> to vector<2x1xf32>
    %39 = vector.shape_cast %38 : vector<2x1xf32> to vector<2x1x1xf32>
    %40 = tpu.reciprocal %39 {approx = true} : vector<2x1x1xf32> -> vector<2x1x1xf32>
    %41 = vector.broadcast %40 : vector<2x1x1xf32> to vector<2x1x8xf32>
    %42 = arith.mulf %37, %41 : vector<2x1x8xf32>
    %43 = arith.truncf %42 : vector<2x1x8xf32> to vector<2x1x8xbf16>
    %44 = arith.truncf %29 : vector<2x8x8xf32> to vector<2x8x8xbf16>
    "tpu.trace_start"() <{level = 10 : i32, message = "bts,bsd->btd"}> : () -> ()
    %cst_22 = arith.constant dense<0.000000e+00> : vector<2x1x8xf32>
    %45 = tpu.matmul %43, %44, %cst_22 {dimension_numbers = #tpu.dot_dimension_numbers<[2], [1], [1], [2], [0, 0, 0, 1, 1, 2], [0], [0]>} : vector<2x1x8xbf16>, vector<2x8x8xbf16>, vector<2x1x8xf32> -> vector<2x1x8xf32>
    "tpu.trace_stop"() : () -> ()
    %46 = vector.extract_strided_slice %11 {offsets = [0, 8], sizes = [2, 8], strides = [1, 1]} : vector<2x32xf32> to vector<2x8xf32>
    %47 = vector.shape_cast %46 : vector<2x8xf32> to vector<2x1x8xf32>
    %48 = vector.extract_strided_slice %17 {offsets = [0, 8], sizes = [16, 8], strides = [1, 1]} : vector<16x32xf32> to vector<16x8xf32>
    %49 = vector.shape_cast %48 : vector<16x8xf32> to vector<2x8x8xf32>
    %50 = vector.extract_strided_slice %23 {offsets = [0, 8], sizes = [16, 8], strides = [1, 1]} : vector<16x32xf32> to vector<16x8xf32>
    %51 = vector.shape_cast %50 : vector<16x8xf32> to vector<2x8x8xf32>
    %52 = arith.truncf %47 : vector<2x1x8xf32> to vector<2x1x8xbf16>
    %53 = arith.truncf %49 : vector<2x8x8xf32> to vector<2x8x8xbf16>
    "tpu.trace_start"() <{level = 10 : i32, message = "btd,bsd->bts"}> : () -> ()
    %cst_23 = arith.constant dense<0.000000e+00> : vector<2x1x8xf32>
    %54 = tpu.matmul %52, %53, %cst_23 {dimension_numbers = #tpu.dot_dimension_numbers<[2], [2], [1], [1], [0, 0, 0, 1, 1, 1], [0], [0]>} : vector<2x1x8xbf16>, vector<2x8x8xbf16>, vector<2x1x8xf32> -> vector<2x1x8xf32>
    "tpu.trace_stop"() : () -> ()
    %cst_24 = arith.constant dense<0xFF800000> : vector<2x1xf32>
    %55 = vector.multi_reduction <maximumf>, %54, %cst_24 [2] : vector<2x1x8xf32> to vector<2x1xf32>
    %56 = vector.shape_cast %55 : vector<2x1xf32> to vector<2x1x1xf32>
    %57 = vector.broadcast %56 : vector<2x1x1xf32> to vector<2x1x8xf32>
    %58 = arith.subf %54, %57 : vector<2x1x8xf32>
    %59 = math.exp %58 : vector<2x1x8xf32>
    %cst_25 = arith.constant dense<0.000000e+00> : vector<2x1xf32>
    %60 = vector.multi_reduction <add>, %59, %cst_25 [2] : vector<2x1x8xf32> to vector<2x1xf32>
    %61 = vector.shape_cast %60 : vector<2x1xf32> to vector<2x1x1xf32>
    %62 = tpu.reciprocal %61 {approx = true} : vector<2x1x1xf32> -> vector<2x1x1xf32>
    %63 = vector.broadcast %62 : vector<2x1x1xf32> to vector<2x1x8xf32>
    %64 = arith.mulf %59, %63 : vector<2x1x8xf32>
    %65 = arith.truncf %64 : vector<2x1x8xf32> to vector<2x1x8xbf16>
    %66 = arith.truncf %51 : vector<2x8x8xf32> to vector<2x8x8xbf16>
    "tpu.trace_start"() <{level = 10 : i32, message = "bts,bsd->btd"}> : () -> ()
    %cst_26 = arith.constant dense<0.000000e+00> : vector<2x1x8xf32>
    %67 = tpu.matmul %65, %66, %cst_26 {dimension_numbers = #tpu.dot_dimension_numbers<[2], [1], [1], [2], [0, 0, 0, 1, 1, 2], [0], [0]>} : vector<2x1x8xbf16>, vector<2x8x8xbf16>, vector<2x1x8xf32> -> vector<2x1x8xf32>
    "tpu.trace_stop"() : () -> ()
    %68 = vector.extract_strided_slice %11 {offsets = [0, 16], sizes = [2, 8], strides = [1, 1]} : vector<2x32xf32> to vector<2x8xf32>
    %69 = vector.shape_cast %68 : vector<2x8xf32> to vector<2x1x8xf32>
    %70 = vector.extract_strided_slice %17 {offsets = [0, 16], sizes = [16, 8], strides = [1, 1]} : vector<16x32xf32> to vector<16x8xf32>
    %71 = vector.shape_cast %70 : vector<16x8xf32> to vector<2x8x8xf32>
    %72 = vector.extract_strided_slice %23 {offsets = [0, 16], sizes = [16, 8], strides = [1, 1]} : vector<16x32xf32> to vector<16x8xf32>
    %73 = vector.shape_cast %72 : vector<16x8xf32> to vector<2x8x8xf32>
    %74 = arith.truncf %69 : vector<2x1x8xf32> to vector<2x1x8xbf16>
    %75 = arith.truncf %71 : vector<2x8x8xf32> to vector<2x8x8xbf16>
    "tpu.trace_start"() <{level = 10 : i32, message = "btd,bsd->bts"}> : () -> ()
    %cst_27 = arith.constant dense<0.000000e+00> : vector<2x1x8xf32>
    %76 = tpu.matmul %74, %75, %cst_27 {dimension_numbers = #tpu.dot_dimension_numbers<[2], [2], [1], [1], [0, 0, 0, 1, 1, 1], [0], [0]>} : vector<2x1x8xbf16>, vector<2x8x8xbf16>, vector<2x1x8xf32> -> vector<2x1x8xf32>
    "tpu.trace_stop"() : () -> ()
    %cst_28 = arith.constant dense<0xFF800000> : vector<2x1xf32>
    %77 = vector.multi_reduction <maximumf>, %76, %cst_28 [2] : vector<2x1x8xf32> to vector<2x1xf32>
    %78 = vector.shape_cast %77 : vector<2x1xf32> to vector<2x1x1xf32>
    %79 = vector.broadcast %78 : vector<2x1x1xf32> to vector<2x1x8xf32>
    %80 = arith.subf %76, %79 : vector<2x1x8xf32>
    %81 = math.exp %80 : vector<2x1x8xf32>
    %cst_29 = arith.constant dense<0.000000e+00> : vector<2x1xf32>
    %82 = vector.multi_reduction <add>, %81, %cst_29 [2] : vector<2x1x8xf32> to vector<2x1xf32>
    %83 = vector.shape_cast %82 : vector<2x1xf32> to vector<2x1x1xf32>
    %84 = tpu.reciprocal %83 {approx = true} : vector<2x1x1xf32> -> vector<2x1x1xf32>
    %85 = vector.broadcast %84 : vector<2x1x1xf32> to vector<2x1x8xf32>
    %86 = arith.mulf %81, %85 : vector<2x1x8xf32>
    %87 = arith.truncf %86 : vector<2x1x8xf32> to vector<2x1x8xbf16>
    %88 = arith.truncf %73 : vector<2x8x8xf32> to vector<2x8x8xbf16>
    "tpu.trace_start"() <{level = 10 : i32, message = "bts,bsd->btd"}> : () -> ()
    %cst_30 = arith.constant dense<0.000000e+00> : vector<2x1x8xf32>
    %89 = tpu.matmul %87, %88, %cst_30 {dimension_numbers = #tpu.dot_dimension_numbers<[2], [1], [1], [2], [0, 0, 0, 1, 1, 2], [0], [0]>} : vector<2x1x8xbf16>, vector<2x8x8xbf16>, vector<2x1x8xf32> -> vector<2x1x8xf32>
    "tpu.trace_stop"() : () -> ()
    %90 = vector.extract_strided_slice %11 {offsets = [0, 24], sizes = [2, 8], strides = [1, 1]} : vector<2x32xf32> to vector<2x8xf32>
    %91 = vector.shape_cast %90 : vector<2x8xf32> to vector<2x1x8xf32>
    %92 = vector.extract_strided_slice %17 {offsets = [0, 24], sizes = [16, 8], strides = [1, 1]} : vector<16x32xf32> to vector<16x8xf32>
    %93 = vector.shape_cast %92 : vector<16x8xf32> to vector<2x8x8xf32>
    %94 = vector.extract_strided_slice %23 {offsets = [0, 24], sizes = [16, 8], strides = [1, 1]} : vector<16x32xf32> to vector<16x8xf32>
    %95 = vector.shape_cast %94 : vector<16x8xf32> to vector<2x8x8xf32>
    %96 = arith.truncf %91 : vector<2x1x8xf32> to vector<2x1x8xbf16>
    %97 = arith.truncf %93 : vector<2x8x8xf32> to vector<2x8x8xbf16>
    "tpu.trace_start"() <{level = 10 : i32, message = "btd,bsd->bts"}> : () -> ()
    %cst_31 = arith.constant dense<0.000000e+00> : vector<2x1x8xf32>
    %98 = tpu.matmul %96, %97, %cst_31 {dimension_numbers = #tpu.dot_dimension_numbers<[2], [2], [1], [1], [0, 0, 0, 1, 1, 1], [0], [0]>} : vector<2x1x8xbf16>, vector<2x8x8xbf16>, vector<2x1x8xf32> -> vector<2x1x8xf32>
    "tpu.trace_stop"() : () -> ()
    %cst_32 = arith.constant dense<0xFF800000> : vector<2x1xf32>
    %99 = vector.multi_reduction <maximumf>, %98, %cst_32 [2] : vector<2x1x8xf32> to vector<2x1xf32>
    %100 = vector.shape_cast %99 : vector<2x1xf32> to vector<2x1x1xf32>
    %101 = vector.broadcast %100 : vector<2x1x1xf32> to vector<2x1x8xf32>
    %102 = arith.subf %98, %101 : vector<2x1x8xf32>
    %103 = math.exp %102 : vector<2x1x8xf32>
    %cst_33 = arith.constant dense<0.000000e+00> : vector<2x1xf32>
    %104 = vector.multi_reduction <add>, %103, %cst_33 [2] : vector<2x1x8xf32> to vector<2x1xf32>
    %105 = vector.shape_cast %104 : vector<2x1xf32> to vector<2x1x1xf32>
    %106 = tpu.reciprocal %105 {approx = true} : vector<2x1x1xf32> -> vector<2x1x1xf32>
    %107 = vector.broadcast %106 : vector<2x1x1xf32> to vector<2x1x8xf32>
    %108 = arith.mulf %103, %107 : vector<2x1x8xf32>
    %109 = arith.truncf %108 : vector<2x1x8xf32> to vector<2x1x8xbf16>
    %110 = arith.truncf %95 : vector<2x8x8xf32> to vector<2x8x8xbf16>
    "tpu.trace_start"() <{level = 10 : i32, message = "bts,bsd->btd"}> : () -> ()
    %cst_34 = arith.constant dense<0.000000e+00> : vector<2x1x8xf32>
    %111 = tpu.matmul %109, %110, %cst_34 {dimension_numbers = #tpu.dot_dimension_numbers<[2], [1], [1], [2], [0, 0, 0, 1, 1, 2], [0], [0]>} : vector<2x1x8xbf16>, vector<2x8x8xbf16>, vector<2x1x8xf32> -> vector<2x1x8xf32>
    "tpu.trace_stop"() : () -> ()
    %112 = tpu.concatenate %45, %67, %89, %111 in 2 : vector<2x1x8xf32>, vector<2x1x8xf32>, vector<2x1x8xf32>, vector<2x1x8xf32> -> vector<2x1x32xf32>
    %113 = vector.shape_cast %112 : vector<2x1x32xf32> to vector<2x32xf32>
    %114 = arith.truncf %113 : vector<2x32xf32> to vector<2x32xbf16>
    %c0_35 = arith.constant 0 : index
    %c0_36 = arith.constant 0 : index
    %115 = vector.load %arg9[%c0_35, %c0_36] : memref<32x32xbf16, #tpu.memory_space<vmem>>, vector<32x32xbf16>
    %cst_37 = arith.constant dense<0.000000e+00> : vector<2x32xf32>
    %116 = tpu.matmul %114, %115, %cst_37 {dimension_numbers = #tpu.dot_dimension_numbers<[1], [0], [0], [1], [0, 0, 1, 1], [], []>} : vector<2x32xbf16>, vector<32x32xbf16>, vector<2x32xf32> -> vector<2x32xf32>
    %c0_38 = arith.constant 0 : index
    %c0_39 = arith.constant 0 : index
    %117 = vector.load %arg10[%c0_38, %c0_39] : memref<1x32xf32, #tpu.memory_space<vmem>>, vector<1x32xf32>
    %118 = vector.broadcast %117 : vector<1x32xf32> to vector<2x32xf32>
    %119 = arith.addf %116, %118 : vector<2x32xf32>
    %120 = arith.addf %119, %3 : vector<2x32xf32>
    %c0_40 = arith.constant 0 : index
    %c0_41 = arith.constant 0 : index
    %121 = vector.load %arg11[%c0_40, %c0_41] : memref<1x32xf32, #tpu.memory_space<vmem>>, vector<1x32xf32>
    %c0_42 = arith.constant 0 : index
    %c0_43 = arith.constant 0 : index
    %122 = vector.load %arg12[%c0_42, %c0_43] : memref<1x32xf32, #tpu.memory_space<vmem>>, vector<1x32xf32>
    %cst_44 = arith.constant dense<0.000000e+00> : vector<2xf32>
    %123 = vector.multi_reduction <add>, %120, %cst_44 [1] : vector<2x32xf32> to vector<2xf32>
    %124 = vector.shape_cast %123 : vector<2xf32> to vector<2x1xf32>
    %cst_45 = arith.constant 3.200000e+01 : f32
    %125 = vector.broadcast %cst_45 : f32 to vector<2x1xf32>
    %126 = arith.divf %124, %125 : vector<2x1xf32>
    %127 = vector.broadcast %126 : vector<2x1xf32> to vector<2x32xf32>
    %128 = arith.subf %120, %127 : vector<2x32xf32>
    %129 = arith.mulf %128, %128 : vector<2x32xf32>
    %cst_46 = arith.constant dense<0.000000e+00> : vector<2xf32>
    %130 = vector.multi_reduction <add>, %129, %cst_46 [1] : vector<2x32xf32> to vector<2xf32>
    %131 = vector.shape_cast %130 : vector<2xf32> to vector<2x1xf32>
    %cst_47 = arith.constant 3.200000e+01 : f32
    %132 = vector.broadcast %cst_47 : f32 to vector<2x1xf32>
    %133 = arith.divf %131, %132 : vector<2x1xf32>
    %134 = vector.broadcast %126 : vector<2x1xf32> to vector<2x32xf32>
    %135 = arith.subf %120, %134 : vector<2x32xf32>
    %cst_48 = arith.constant 9.99999974E-6 : f32
    %136 = vector.broadcast %cst_48 : f32 to vector<2x1xf32>
    %137 = arith.addf %133, %136 : vector<2x1xf32>
    %138 = math.rsqrt %137 : vector<2x1xf32>
    %139 = vector.broadcast %138 : vector<2x1xf32> to vector<2x32xf32>
    %140 = arith.mulf %135, %139 : vector<2x32xf32>
    %141 = vector.broadcast %121 : vector<1x32xf32> to vector<2x32xf32>
    %142 = arith.mulf %140, %141 : vector<2x32xf32>
    %143 = vector.broadcast %122 : vector<1x32xf32> to vector<2x32xf32>
    %144 = arith.addf %142, %143 : vector<2x32xf32>
    %145 = arith.truncf %144 : vector<2x32xf32> to vector<2x32xbf16>
    %c0_49 = arith.constant 0 : index
    %c0_50 = arith.constant 0 : index
    %146 = vector.load %arg13[%c0_49, %c0_50] : memref<32x64xbf16, #tpu.memory_space<vmem>>, vector<32x64xbf16>
    %cst_51 = arith.constant dense<0.000000e+00> : vector<2x64xf32>
    %147 = tpu.matmul %145, %146, %cst_51 {dimension_numbers = #tpu.dot_dimension_numbers<[1], [0], [0], [1], [0, 0, 1, 1], [], []>} : vector<2x32xbf16>, vector<32x64xbf16>, vector<2x64xf32> -> vector<2x64xf32>
    %c0_52 = arith.constant 0 : index
    %c0_53 = arith.constant 0 : index
    %148 = vector.load %arg14[%c0_52, %c0_53] : memref<1x64xf32, #tpu.memory_space<vmem>>, vector<1x64xf32>
    %149 = vector.broadcast %148 : vector<1x64xf32> to vector<2x64xf32>
    %150 = arith.addf %147, %149 : vector<2x64xf32>
    %cst_54 = arith.constant 0.000000e+00 : f32
    %151 = vector.broadcast %cst_54 : f32 to vector<2x64xf32>
    %152 = arith.maximumf %150, %151 : vector<2x64xf32>
    %153 = arith.truncf %152 : vector<2x64xf32> to vector<2x64xbf16>
    %c0_55 = arith.constant 0 : index
    %c0_56 = arith.constant 0 : index
    %154 = vector.load %arg15[%c0_55, %c0_56] : memref<64x32xbf16, #tpu.memory_space<vmem>>, vector<64x32xbf16>
    %cst_57 = arith.constant dense<0.000000e+00> : vector<2x32xf32>
    %155 = tpu.matmul %153, %154, %cst_57 {dimension_numbers = #tpu.dot_dimension_numbers<[1], [0], [0], [1], [0, 0, 1, 1], [], []>} : vector<2x64xbf16>, vector<64x32xbf16>, vector<2x32xf32> -> vector<2x32xf32>
    %c0_58 = arith.constant 0 : index
    %c0_59 = arith.constant 0 : index
    %156 = vector.load %arg16[%c0_58, %c0_59] : memref<1x32xf32, #tpu.memory_space<vmem>>, vector<1x32xf32>
    %157 = vector.broadcast %156 : vector<1x32xf32> to vector<2x32xf32>
    %158 = arith.addf %155, %157 : vector<2x32xf32>
    %159 = arith.addf %158, %144 : vector<2x32xf32>
    %c0_60 = arith.constant 0 : index
    %c0_61 = arith.constant 0 : index
    %160 = vector.load %arg17[%c0_60, %c0_61] : memref<1x32xf32, #tpu.memory_space<vmem>>, vector<1x32xf32>
    %c0_62 = arith.constant 0 : index
    %c0_63 = arith.constant 0 : index
    %161 = vector.load %arg18[%c0_62, %c0_63] : memref<1x32xf32, #tpu.memory_space<vmem>>, vector<1x32xf32>
    %cst_64 = arith.constant dense<0.000000e+00> : vector<2xf32>
    %162 = vector.multi_reduction <add>, %159, %cst_64 [1] : vector<2x32xf32> to vector<2xf32>
    %163 = vector.shape_cast %162 : vector<2xf32> to vector<2x1xf32>
    %cst_65 = arith.constant 3.200000e+01 : f32
    %164 = vector.broadcast %cst_65 : f32 to vector<2x1xf32>
    %165 = arith.divf %163, %164 : vector<2x1xf32>
    %166 = vector.broadcast %165 : vector<2x1xf32> to vector<2x32xf32>
    %167 = arith.subf %159, %166 : vector<2x32xf32>
    %168 = arith.mulf %167, %167 : vector<2x32xf32>
    %cst_66 = arith.constant dense<0.000000e+00> : vector<2xf32>
    %169 = vector.multi_reduction <add>, %168, %cst_66 [1] : vector<2x32xf32> to vector<2xf32>
    %170 = vector.shape_cast %169 : vector<2xf32> to vector<2x1xf32>
    %cst_67 = arith.constant 3.200000e+01 : f32
    %171 = vector.broadcast %cst_67 : f32 to vector<2x1xf32>
    %172 = arith.divf %170, %171 : vector<2x1xf32>
    %173 = vector.broadcast %165 : vector<2x1xf32> to vector<2x32xf32>
    %174 = arith.subf %159, %173 : vector<2x32xf32>
    %cst_68 = arith.constant 9.99999974E-6 : f32
    %175 = vector.broadcast %cst_68 : f32 to vector<2x1xf32>
    %176 = arith.addf %172, %175 : vector<2x1xf32>
    %177 = math.rsqrt %176 : vector<2x1xf32>
    %178 = vector.broadcast %177 : vector<2x1xf32> to vector<2x32xf32>
    %179 = arith.mulf %174, %178 : vector<2x32xf32>
    %180 = vector.broadcast %160 : vector<1x32xf32> to vector<2x32xf32>
    %181 = arith.mulf %179, %180 : vector<2x32xf32>
    %182 = vector.broadcast %161 : vector<1x32xf32> to vector<2x32xf32>
    %183 = arith.addf %181, %182 : vector<2x32xf32>
    %184 = vector.shape_cast %183 : vector<2x32xf32> to vector<2x1x32xf32>
    %c0_69 = arith.constant 0 : index
    %c0_70 = arith.constant 0 : index
    %c0_71 = arith.constant 0 : index
    %185 = vector.load %arg19[%c0_69, %c0_70, %c0_71] : memref<2x1x32xf32, #tpu.memory_space<vmem>>, vector<2x1x32xf32>
    tpu.vector_store %arg19[%c0_69, %c0_70, %c0_71], %184 {strides = array<i32>} : memref<2x1x32xf32, #tpu.memory_space<vmem>>, vector<2x1x32xf32>,
    return
  }
  func.func @transform_0(%arg0: i32) -> (i32, i32, i32) {
    %c0_i32 = arith.constant 0 : i32
    %c0_i32_0 = arith.constant 0 : i32
    %c0_i32_1 = arith.constant 0 : i32
    return %arg0, %c0_i32, %c0_i32_0 : i32, i32, i32
  }
  func.func @transform_1(%arg0: i32) -> (i32, i32, i32) {
    %c0_i32 = arith.constant 0 : i32
    %c0_i32_0 = arith.constant 0 : i32
    %c0_i32_1 = arith.constant 0 : i32
    return %arg0, %c0_i32, %c0_i32_0 : i32, i32, i32
  }
  func.func @transform_2(%arg0: i32) -> (i32, i32) {
    %c0_i32 = arith.constant 0 : i32
    %c0_i32_0 = arith.constant 0 : i32
    %c0_i32_1 = arith.constant 0 : i32
    return %c0_i32, %c0_i32_0 : i32, i32
  }
  func.func @transform_3(%arg0: i32) -> (i32, i32) {
    %c0_i32 = arith.constant 0 : i32
    %c0_i32_0 = arith.constant 0 : i32
    %c0_i32_1 = arith.constant 0 : i32
    return %c0_i32, %c0_i32_0 : i32, i32
  }
  func.func @transform_4(%arg0: i32) -> (i32, i32) {
    %c0_i32 = arith.constant 0 : i32
    %c0_i32_0 = arith.constant 0 : i32
    %c0_i32_1 = arith.constant 0 : i32
    return %c0_i32, %c0_i32_0 : i32, i32
  }
  func.func @transform_5(%arg0: i32) -> (i32, i32) {
    %c0_i32 = arith.constant 0 : i32
    %c0_i32_0 = arith.constant 0 : i32
    %c0_i32_1 = arith.constant 0 : i32
    return %c0_i32, %c0_i32_0 : i32, i32
  }
  func.func @transform_6(%arg0: i32) -> (i32, i32) {
    %c0_i32 = arith.constant 0 : i32
    %c0_i32_0 = arith.constant 0 : i32
    %c0_i32_1 = arith.constant 0 : i32
    return %c0_i32, %c0_i32_0 : i32, i32
  }
  func.func @transform_7(%arg0: i32) -> (i32, i32) {
    %c0_i32 = arith.constant 0 : i32
    %c0_i32_0 = arith.constant 0 : i32
    %c0_i32_1 = arith.constant 0 : i32
    return %c0_i32, %c0_i32_0 : i32, i32
  }
  func.func @transform_8(%arg0: i32) -> (i32, i32) {
    %c0_i32 = arith.constant 0 : i32
    %c0_i32_0 = arith.constant 0 : i32
    %c0_i32_1 = arith.constant 0 : i32
    return %c0_i32, %c0_i32_0 : i32, i32
  }
  func.func @transform_9(%arg0: i32) -> (i32, i32) {
    %c0_i32 = arith.constant 0 : i32
    %c0_i32_0 = arith.constant 0 : i32
    %c0_i32_1 = arith.constant 0 : i32
    return %c0_i32, %c0_i32_0 : i32, i32
  }
  func.func @transform_10(%arg0: i32) -> (i32, i32) {
    %c0_i32 = arith.constant 0 : i32
    %c0_i32_0 = arith.constant 0 : i32
    %c0_i32_1 = arith.constant 0 : i32
    return %c0_i32, %c0_i32_0 : i32, i32
  }
  func.func @transform_11(%arg0: i32) -> (i32, i32) {
    %c0_i32 = arith.constant 0 : i32
    %c0_i32_0 = arith.constant 0 : i32
    %c0_i32_1 = arith.constant 0 : i32
    return %c0_i32, %c0_i32_0 : i32, i32
  }
  func.func @transform_12(%arg0: i32) -> (i32, i32) {
    %c0_i32 = arith.constant 0 : i32
    %c0_i32_0 = arith.constant 0 : i32
    %c0_i32_1 = arith.constant 0 : i32
    return %c0_i32, %c0_i32_0 : i32, i32
  }
  func.func @transform_13(%arg0: i32) -> (i32, i32) {
    %c0_i32 = arith.constant 0 : i32
    %c0_i32_0 = arith.constant 0 : i32
    %c0_i32_1 = arith.constant 0 : i32
    return %c0_i32, %c0_i32_0 : i32, i32
  }
  func.func @transform_14(%arg0: i32) -> (i32, i32) {
    %c0_i32 = arith.constant 0 : i32
    %c0_i32_0 = arith.constant 0 : i32
    %c0_i32_1 = arith.constant 0 : i32
    return %c0_i32, %c0_i32_0 : i32, i32
  }
  func.func @transform_15(%arg0: i32) -> (i32, i32) {
    %c0_i32 = arith.constant 0 : i32
    %c0_i32_0 = arith.constant 0 : i32
    %c0_i32_1 = arith.constant 0 : i32
    return %c0_i32, %c0_i32_0 : i32, i32
  }
  func.func @transform_16(%arg0: i32) -> (i32, i32) {
    %c0_i32 = arith.constant 0 : i32
    %c0_i32_0 = arith.constant 0 : i32
    %c0_i32_1 = arith.constant 0 : i32
    return %c0_i32, %c0_i32_0 : i32, i32
  }
  func.func @transform_17(%arg0: i32) -> (i32, i32) {
    %c0_i32 = arith.constant 0 : i32
    %c0_i32_0 = arith.constant 0 : i32
    %c0_i32_1 = arith.constant 0 : i32
    return %c0_i32, %c0_i32_0 : i32, i32
  }
  func.func @transform_18(%arg0: i32) -> (i32, i32, i32) {
    %c0_i32 = arith.constant 0 : i32
    %c0_i32_0 = arith.constant 0 : i32
    %c0_i32_1 = arith.constant 0 : i32
    return %arg0, %c0_i32, %c0_i32_0 : i32, i32, i32
  }
}

</mosaic_0001>

<llo_original>
// kernel: tpu_custom_call.1
$region0: #{tpu_custom_call.1}
  #allocation0 [shape = 'u32[]', space=smem, size = 0x4, offset = 0x4, fixed_abs, tag = 'smem constant byte address 0x4 - core index']
  #allocation1 [shape = 'u32[72,128]{1,0:T(1,128)}', space=vmem, size = 0x9000, scoped, tag = 'internal scratch']
  %s0 = inlined_call_operand.vmem [shape: f32[2,8,32], index: 0, kind: input, shape index: {}]
  %s1 = inlined_call_operand.vmem [shape: f32[2,8,32], index: 1, kind: input, shape index: {}]
  %s2 = inlined_call_operand.vmem [shape: bf16[32,32], index: 2, kind: input, shape index: {}]
  %s3 = inlined_call_operand.vmem [shape: f32[1,32], index: 3, kind: input, shape index: {}]
  %s4 = inlined_call_operand.hbm [shape: bf16[32,32], index: 4, kind: input, shape index: {}]
  %s5 = inlined_call_operand.vmem [shape: f32[1,32], index: 5, kind: input, shape index: {}]
  %s6 = inlined_call_operand.hbm [shape: bf16[32,32], index: 6, kind: input, shape index: {}]
  %s7 = inlined_call_operand.vmem [shape: f32[1,32], index: 7, kind: input, shape index: {}]
  %s8 = inlined_call_operand.hbm [shape: bf16[32,32], index: 8, kind: input, shape index: {}]
  %s9 = inlined_call_operand.vmem [shape: f32[1,32], index: 9, kind: input, shape index: {}]
  %s10 = inlined_call_operand.vmem [shape: f32[1,32], index: 10, kind: input, shape index: {}]
  %s11 = inlined_call_operand.vmem [shape: f32[1,32], index: 11, kind: input, shape index: {}]
  %s12 = inlined_call_operand.hbm [shape: bf16[32,64], index: 12, kind: input, shape index: {}]
  %s13 = inlined_call_operand.vmem [shape: f32[1,64], index: 13, kind: input, shape index: {}]
  %s14 = inlined_call_operand.vmem [shape: bf16[64,32], index: 14, kind: input, shape index: {}]
  %s15 = inlined_call_operand.vmem [shape: f32[1,32], index: 15, kind: input, shape index: {}]
  %s16 = inlined_call_operand.vmem [shape: f32[1,32], index: 16, kind: input, shape index: {}]
  %s17 = inlined_call_operand.vmem [shape: f32[1,32], index: 17, kind: input, shape index: {}]
  %s18 = inlined_call_operand.hbm [shape: f32[2,1,32], index: 18, kind: output, shape index: {}]
  %s19 = sld [smem:[#allocation0]]
  $region98: #{tpu_custom_call.1} parent=0
    _
  %s21 = ssub.s32 1, %s19
  %s22 = scalar_select 0, %s21, %s19
  $region1: #{tpu_custom_call.1} parent=0
    #allocation2 [shape = 'u8[8192]{0}', space=vmem, size = 0x2000, scoped, tag = 'input window, operand 4, single buffered']
    #allocation3 [shape = 's32[1]{0}', space=sflag, size = 0x4, scoped, tag = 'scoped memory for tpu_custom_call.1']
    #allocation4 [shape = 's32[1]{0}', space=sflag, size = 0x4, scoped, tag = 'scoped memory for tpu_custom_call.1']
    #allocation5 [shape = 'u8[8192]{0}', space=vmem, size = 0x2000, scoped, tag = 'input window, operand 6, single buffered']
    #allocation6 [shape = 's32[1]{0}', space=sflag, size = 0x4, scoped, tag = 'scoped memory for tpu_custom_call.1']
    #allocation7 [shape = 'u8[8192]{0}', space=vmem, size = 0x2000, scoped, tag = 'input window, operand 8, single buffered']
    #allocation8 [shape = 'u8[8192]{0}', space=vmem, size = 0x2000, scoped, tag = 'input window, operand 12, single buffered']
    #allocation9 [shape = 's32[1]{0}', space=sflag, size = 0x4, scoped, tag = 'scoped memory for tpu_custom_call.1']
    #allocation10 [shape = 'u8[1024]{0}', space=vmem, size = 0x400, scoped, tag = 'output window, operand 0, single buffered']
    %23 = vsyncpa [#allocation3], 0
    %24 = vsyncpa [#allocation6], 0
    %25 = vsyncpa [#allocation9], 0
    %26 = vsyncpa [#allocation4], 0
    // Predicated region
    $region2: #{tpu_custom_call.1} parent=1 // pred_check
      _
    $region3: #{tpu_custom_call.1} parent=1 // pred_check_branch
      %28 = sbr.rel (0) target = $region5
    $region4: #{tpu_custom_call.1} parent=1 // pred_region
      _
    $region5: #{tpu_custom_call.1} parent=1 // pred_fallthru
      _
    // Predicated region
    $region6: #{tpu_custom_call.1} parent=1 // pred_check
      _
    $region7: #{tpu_custom_call.1} parent=1 // pred_check_branch
      %30 = sbr.rel (0) target = $region9
    $region8: #{tpu_custom_call.1} parent=1 // pred_region
      _
    $region9: #{tpu_custom_call.1} parent=1 // pred_fallthru
      _
    // Predicated region
    $region10: #{tpu_custom_call.1} parent=1 // pred_check
      _
    $region11: #{tpu_custom_call.1} parent=1 // pred_check_branch
      %32 = sbr.rel (0) target = $region13
    $region12: #{tpu_custom_call.1} parent=1 // pred_region
      _
    $region13: #{tpu_custom_call.1} parent=1 // pred_fallthru
      _
    // Predicated region
    $region14: #{tpu_custom_call.1} parent=1 // pred_check
      _
    $region15: #{tpu_custom_call.1} parent=1 // pred_check_branch
      %34 = sbr.rel (0) target = $region17
    $region16: #{tpu_custom_call.1} parent=1 // pred_region
      _
    $region17: #{tpu_custom_call.1} parent=1 // pred_fallthru
      _
    // Predicated region
    $region18: #{tpu_custom_call.1} parent=1 // pred_check
      _
    $region19: #{tpu_custom_call.1} parent=1 // pred_check_branch
      %36 = sbr.rel (0) target = $region21
    $region20: #{tpu_custom_call.1} parent=1 // pred_region
      %38 = vsyncadd [#allocation3], 0
      %s39 = sshll.u32 %s4, 4
      %s40 = int_to_ptr.hbm [resolvable:$true] %s39
      %s41 = sshll.u32 [#allocation2], 4
      %s42 = int_to_ptr.vmem [resolvable:$true] %s41
      %47 = dma.hbm_to_vmem [thread:$0]  %s40, 256, %s42, [#allocation3], 64, 64, 4
    $region21: #{tpu_custom_call.1} parent=1 // pred_fallthru
      _
    // Predicated region
    $region22: #{tpu_custom_call.1} parent=1 // pred_check
      _
    $region23: #{tpu_custom_call.1} parent=1 // pred_check_branch
      %49 = sbr.rel (0) target = $region25
    $region24: #{tpu_custom_call.1} parent=1 // pred_region
      _
    $region25: #{tpu_custom_call.1} parent=1 // pred_fallthru
      _
    // Predicated region
    $region26: #{tpu_custom_call.1} parent=1 // pred_check
      _
    $region27: #{tpu_custom_call.1} parent=1 // pred_check_branch
      %51 = sbr.rel (0) target = $region29
    $region28: #{tpu_custom_call.1} parent=1 // pred_region
      %53 = vsyncadd [#allocation6], 0
      %s54 = sshll.u32 %s6, 4
      %s55 = int_to_ptr.hbm [resolvable:$true] %s54
      %s56 = sshll.u32 [#allocation5], 4
      %s57 = int_to_ptr.vmem [resolvable:$true] %s56
      %62 = dma.hbm_to_vmem [thread:$0]  %s55, 256, %s57, [#allocation6], 64, 64, 4
    $region29: #{tpu_custom_call.1} parent=1 // pred_fallthru
      _
    // Predicated region
    $region30: #{tpu_custom_call.1} parent=1 // pred_check
      _
    $region31: #{tpu_custom_call.1} parent=1 // pred_check_branch
      %64 = sbr.rel (0) target = $region33
    $region32: #{tpu_custom_call.1} parent=1 // pred_region
      _
    $region33: #{tpu_custom_call.1} parent=1 // pred_fallthru
      _
    // Predicated region
    $region34: #{tpu_custom_call.1} parent=1 // pred_check
      _
    $region35: #{tpu_custom_call.1} parent=1 // pred_check_branch
      %66 = sbr.rel (0) target = $region37
    $region36: #{tpu_custom_call.1} parent=1 // pred_region
      %68 = vsyncadd [#allocation6], 0
      %s69 = sshll.u32 %s8, 4
      %s70 = int_to_ptr.hbm [resolvable:$true] %s69
      %s71 = sshll.u32 [#allocation7], 4
      %s72 = int_to_ptr.vmem [resolvable:$true] %s71
      %77 = dma.hbm_to_vmem [thread:$0]  %s70, 256, %s72, [#allocation6], 64, 64, 4
    $region37: #{tpu_custom_call.1} parent=1 // pred_fallthru
      _
    // Predicated region
    $region38: #{tpu_custom_call.1} parent=1 // pred_check
      _
    $region39: #{tpu_custom_call.1} parent=1 // pred_check_branch
      %79 = sbr.rel (0) target = $region41
    $region40: #{tpu_custom_call.1} parent=1 // pred_region
      _
    $region41: #{tpu_custom_call.1} parent=1 // pred_fallthru
      _
    // Predicated region
    $region42: #{tpu_custom_call.1} parent=1 // pred_check
      _
    $region43: #{tpu_custom_call.1} parent=1 // pred_check_branch
      %81 = sbr.rel (0) target = $region45
    $region44: #{tpu_custom_call.1} parent=1 // pred_region
      _
    $region45: #{tpu_custom_call.1} parent=1 // pred_fallthru
      _
    // Predicated region
    $region46: #{tpu_custom_call.1} parent=1 // pred_check
      _
    $region47: #{tpu_custom_call.1} parent=1 // pred_check_branch
      %83 = sbr.rel (0) target = $region49
    $region48: #{tpu_custom_call.1} parent=1 // pred_region
      _
    $region49: #{tpu_custom_call.1} parent=1 // pred_fallthru
      _
    // Predicated region
    $region50: #{tpu_custom_call.1} parent=1 // pred_check
      _
    $region51: #{tpu_custom_call.1} parent=1 // pred_check_branch
      %85 = sbr.rel (0) target = $region53
    $region52: #{tpu_custom_call.1} parent=1 // pred_region
      %87 = vsyncadd [#allocation9], 0
      %s88 = sshll.u32 %s12, 4
      %s89 = int_to_ptr.hbm [resolvable:$true] %s88
      %s90 = sshll.u32 [#allocation8], 4
      %s91 = int_to_ptr.vmem [resolvable:$true] %s90
      %96 = dma.hbm_to_vmem [thread:$0]  %s89, 256, %s91, [#allocation9], 64, 64, 4
    $region53: #{tpu_custom_call.1} parent=1 // pred_fallthru
      _
    // Predicated region
    $region54: #{tpu_custom_call.1} parent=1 // pred_check
      _
    $region55: #{tpu_custom_call.1} parent=1 // pred_check_branch
      %98 = sbr.rel (0) target = $region57
    $region56: #{tpu_custom_call.1} parent=1 // pred_region
      _
    $region57: #{tpu_custom_call.1} parent=1 // pred_fallthru
      _
    // Predicated region
    $region58: #{tpu_custom_call.1} parent=1 // pred_check
      _
    $region59: #{tpu_custom_call.1} parent=1 // pred_check_branch
      %100 = sbr.rel (0) target = $region61
    $region60: #{tpu_custom_call.1} parent=1 // pred_region
      _
    $region61: #{tpu_custom_call.1} parent=1 // pred_fallthru
      _
    // Predicated region
    $region62: #{tpu_custom_call.1} parent=1 // pred_check
      _
    $region63: #{tpu_custom_call.1} parent=1 // pred_check_branch
      %102 = sbr.rel (0) target = $region65
    $region64: #{tpu_custom_call.1} parent=1 // pred_region
      _
    $region65: #{tpu_custom_call.1} parent=1 // pred_fallthru
      _
    // Predicated region
    $region66: #{tpu_custom_call.1} parent=1 // pred_check
      _
    $region67: #{tpu_custom_call.1} parent=1 // pred_check_branch
      %104 = sbr.rel (0) target = $region69
    $region68: #{tpu_custom_call.1} parent=1 // pred_region
      _
    $region69: #{tpu_custom_call.1} parent=1 // pred_fallthru
      _
    // Predicated region
    $region70: #{tpu_custom_call.1} parent=1 // pred_check
      _
    $region71: #{tpu_custom_call.1} parent=1 // pred_check_branch
      %106 = sbr.rel (0) target = $region73
    $region72: #{tpu_custom_call.1} parent=1 // pred_region
      _
    $region73: #{tpu_custom_call.1} parent=1 // pred_fallthru
      _
    // Predicated region
    $region74: #{tpu_custom_call.1} parent=1 // pred_check
      _
    $region75: #{tpu_custom_call.1} parent=1 // pred_check_branch
      %108 = sbr.rel (0) target = $region77
    $region76: #{tpu_custom_call.1} parent=1 // pred_region
      %110 = dma.done [#allocation3], 256
    $region77: #{tpu_custom_call.1} parent=1 // pred_fallthru
      _
    // Predicated region
    $region78: #{tpu_custom_call.1} parent=1 // pred_check
      _
    $region79: #{tpu_custom_call.1} parent=1 // pred_check_branch
      %112 = sbr.rel (0) target = $region81
    $region80: #{tpu_custom_call.1} parent=1 // pred_region
      %114 = dma.done [#allocation6], 256
    $region81: #{tpu_custom_call.1} parent=1 // pred_fallthru
      _
    // Predicated region
    $region82: #{tpu_custom_call.1} parent=1 // pred_check
      _
    $region83: #{tpu_custom_call.1} parent=1 // pred_check_branch
      %116 = sbr.rel (0) target = $region85
    $region84: #{tpu_custom_call.1} parent=1 // pred_region
      %118 = dma.done [#allocation6], 256
    $region85: #{tpu_custom_call.1} parent=1 // pred_fallthru
      _
    // Predicated region
    $region86: #{tpu_custom_call.1} parent=1 // pred_check
      _
    $region87: #{tpu_custom_call.1} parent=1 // pred_check_branch
      %120 = sbr.rel (0) target = $region89
    $region88: #{tpu_custom_call.1} parent=1 // pred_region
      %122 = dma.done [#allocation9], 256
    $region89: #{tpu_custom_call.1} parent=1 // pred_fallthru
      _
    %v124 = vld [vmem:[%s0] sm:$0xff]
    %v125 = vld [vmem:[%s0 + $0x8] sm:$0xff]
    %v126 = vld [vmem:[%s1] sm:$0xff]
    %v127 = vld [vmem:[%s1 + $0x8] sm:$0xff]
    %v128 = vpack.c.bf16 %v124, %v124
    %v129 = vpack.c.bf16 %v125, %v125
    %v130 = vld [vmem:[%s2] sm:$0xf]
    %v131 = vld [vmem:[%s2 + $0x4] sm:$0xf]
    %v132 = vld [vmem:[%s2 + $0x8] sm:$0xf]
    %v133 = vld [vmem:[%s2 + $0xc] sm:$0xf]
    %v134 = vld [vmem:[%s3] sm:$0x1]
    %v136 = vperm.slane %v134, 0
    %v140 = vunpack.c.l.b16 %v128
    %v141 = vunpack.c.l.b16 %v129
    %v142 = vrot.slane %v140, 7
    %v143 = vrot.slane %v141, 6
    %vm144 = vcmask 1041409
    %v145 = vsel %vm144, %v143, %v142
    %v146 = vpack.c.b16 %v145, %v145
    %v151 = vunpack.c.l.b16 %v130
    %v152 = vunpack.c.l.b16 %v131
    %v153 = vunpack.c.l.b16 %v132
    %v154 = vunpack.c.l.b16 %v133
    %v155 = vpack.c.b16 %v152, %v151
    %v156 = vpack.c.b16 %v154, %v153
    %vm159 = vcmask 261120
    %v161 = vsel %vm159, %v146, 0
    %163 = vmatpush.bf16.msra.mxu0 0
    %164 = vmatpush.bf16.msra.mxu0 0
    %165 = vmatpush.bf16.msra.mxu0 0
    %166 = vmatpush.bf16.msra.mxu0 0
    %167 = vmatpush.bf16.msra.mxu0 0
    %168 = vmatpush.bf16.msra.mxu0 0
    %169 = vmatpush.bf16.msra.mxu0 %v156
    %170 = vmatpush.bf16.msra.mxu0 %v155
    %171 = vmatmul.bf16.gmra.mxu0 %v161
    %v172 = vpop.f32.mrf.mxu0
    %v173 = vadd.f32 %v136, %v172
    %v174 = vpop.f32.mrf.mxu0
    %175 = vdwg.mxu0
    %v176 = vpack.c.bf16 %v125, %v124
    %v177 = vld [vmem:[#allocation2] sm:$0xf]
    %v178 = vld [vmem:[#allocation2 + $0x4] sm:$0xf]
    %v179 = vld [vmem:[#allocation2 + $0x8] sm:$0xf]
    %v180 = vld [vmem:[#allocation2 + $0xc] sm:$0xf]
    %v181 = vld [vmem:[%s5] sm:$0x1]
    %v183 = vperm.slane %v181, 0
    %v189 = vunpack.c.l.b16 %v177
    %v190 = vunpack.c.l.b16 %v178
    %v191 = vunpack.c.l.b16 %v179
    %v192 = vunpack.c.l.b16 %v180
    %v193 = vpack.c.b16 %v190, %v189
    %v194 = vpack.c.b16 %v192, %v191
    %v198 = vsel %vm159, %v176, 0
    %200 = vmatpush.bf16.msra.mxu0 0
    %201 = vmatpush.bf16.msra.mxu0 0
    %202 = vmatpush.bf16.msra.mxu0 0
    %203 = vmatpush.bf16.msra.mxu0 0
    %204 = vmatpush.bf16.msra.mxu0 0
    %205 = vmatpush.bf16.msra.mxu0 0
    %206 = vmatpush.bf16.msra.mxu0 %v194
    %207 = vmatpush.bf16.msra.mxu0 %v193
    %208 = vmatmul.bf16.gmra.mxu0 %v198
    %v209 = vpop.f32.mrf.mxu0
    %v210 = vadd.f32 %v183, %v209
    %v211 = vpop.f32.mrf.mxu0
    %v212 = vadd.f32 %v183, %v211
    %213 = vdwg.mxu0
    %v214 = vpack.c.bf16 %v127, %v126
    %v215 = vld [vmem:[#allocation5] sm:$0xf]
    %v216 = vld [vmem:[#allocation5 + $0x4] sm:$0xf]
    %v217 = vld [vmem:[#allocation5 + $0x8] sm:$0xf]
    %v218 = vld [vmem:[#allocation5 + $0xc] sm:$0xf]
    %v219 = vld [vmem:[%s7] sm:$0x1]
    %v221 = vperm.slane %v219, 0
    %v227 = vunpack.c.l.b16 %v215
    %v228 = vunpack.c.l.b16 %v216
    %v229 = vunpack.c.l.b16 %v217
    %v230 = vunpack.c.l.b16 %v218
    %v231 = vpack.c.b16 %v228, %v227
    %v232 = vpack.c.b16 %v230, %v229
    %v236 = vsel %vm159, %v214, 0
    %238 = vmatpush.bf16.msra.mxu0 0
    %239 = vmatpush.bf16.msra.mxu0 0
    %240 = vmatpush.bf16.msra.mxu0 0
    %241 = vmatpush.bf16.msra.mxu0 0
    %242 = vmatpush.bf16.msra.mxu0 0
    %243 = vmatpush.bf16.msra.mxu0 0
    %244 = vmatpush.bf16.msra.mxu0 %v232
    %245 = vmatpush.bf16.msra.mxu0 %v231
    %246 = vmatmul.bf16.gmra.mxu0 %v236
    %v247 = vpop.f32.mrf.mxu0
    %v248 = vadd.f32 %v221, %v247
    %v249 = vpop.f32.mrf.mxu0
    %v250 = vadd.f32 %v221, %v249
    %251 = vdwg.mxu0
    %v253 = vrot.slane %v173, 1
    %v255 = vpack.c.bf16 %v173, %v173
    %v256 = vpack.c.bf16 %v253, %v253
    %v257 = vpack.c.bf16 %v210, %v210
    %v258 = vpack.c.bf16 %v212, %v212
    %vm259 = vcmask 64512
    %v261 = vsel %vm259, %v255, 0
    %v264 = vsel %vm259, %v257, 0
    %266 = vmatpush.bf16.xpose.msra.mxu0 0
    %267 = vmatpush.bf16.xpose.msra.mxu0 0
    %268 = vmatpush.bf16.xpose.msra.mxu0 0
    %269 = vmatpush.bf16.xpose.msra.mxu0 0
    %270 = vmatpush.bf16.xpose.msra.mxu0 0
    %271 = vmatpush.bf16.xpose.msra.mxu0 0
    %272 = vmatpush.bf16.xpose.msra.mxu0 0
    %273 = vmatpush.bf16.xpose.msra.mxu0 %v264
    %274 = vmatmul.bf16.gmra.mxu0 %v261
    %v275 = vpop.f32.mrf.mxu0
    %v276 = vadd.f32 0.0, %v275
    %v277 = vpop.f32.mrf.mxu0
    %278 = vdwg.mxu0
    %v280 = vsel %vm259, %v256, 0
    %v283 = vsel %vm259, %v258, 0
    %285 = vmatpush.bf16.xpose.msra.mxu0 0
    %286 = vmatpush.bf16.xpose.msra.mxu0 0
    %287 = vmatpush.bf16.xpose.msra.mxu0 0
    %288 = vmatpush.bf16.xpose.msra.mxu0 0
    %289 = vmatpush.bf16.xpose.msra.mxu0 0
    %290 = vmatpush.bf16.xpose.msra.mxu0 0
    %291 = vmatpush.bf16.xpose.msra.mxu0 0
    %292 = vmatpush.bf16.xpose.msra.mxu0 %v283
    %293 = vmatmul.bf16.gmra.mxu0 %v280
    %v294 = vpop.f32.mrf.mxu0
    %v295 = vadd.f32 0.0, %v294
    %v296 = vpop.f32.mrf.mxu0
    %297 = vdwg.mxu0
    %vm298 = vcmask 57344
    %v299 = vsel %vm298, %v276, -inf
    %300 = vmax.xlane.f32.xlu0 %v299
    %v301 = vpop.xlane.xlu0 %300
    %v302 = vsel %vm298, %v295, -inf
    %303 = vmax.xlane.f32.xlu0 %v302
    %v304 = vpop.xlane.xlu0 %303
    %v305 = vsub.f32 %v276, %v301
    %v306 = vsub.f32 %v295, %v304
    %v307 = vmul.f32 %v305, 1.442695
    %v308 = vpow.pop %v307
    %v309 = vmul.f32 %v306, 1.442695
    %v310 = vpow.pop %v309
    %v311 = vsel %vm298, %v308, 0.0
    %312 = vadd.xlane.f32.xlu0 %v311
    %v313 = vpop.xlane.xlu0 %312
    %v314 = vsel %vm298, %v310, 0.0
    %315 = vadd.xlane.f32.xlu0 %v314
    %v316 = vpop.xlane.xlu0 %315
    %v317 = vrcp.pop %v313
    %v318 = vrcp.pop %v316
    %v319 = vmul.f32 %v308, %v317
    %v320 = vmul.f32 %v310, %v318
    %v321 = vpack.c.bf16 %v319, %v319
    %v322 = vpack.c.bf16 %v320, %v320
    %v323 = vpack.c.bf16 %v248, %v248
    %v324 = vpack.c.bf16 %v250, %v250
    %v326 = vsel %vm259, %v321, 0
    %vm328 = vcmask 1043456
    %v330 = vsel %vm328, %v323, 0
    %332 = vmatpush.bf16.msra.mxu0 0
    %333 = vmatpush.bf16.msra.mxu0 0
    %334 = vmatpush.bf16.msra.mxu0 0
    %335 = vmatpush.bf16.msra.mxu0 0
    %336 = vmatpush.bf16.msra.mxu0 0
    %337 = vmatpush.bf16.msra.mxu0 0
    %338 = vmatpush.bf16.msra.mxu0 0
    %339 = vmatpush.bf16.msra.mxu0 %v330
    %340 = vmatmul.bf16.gmra.mxu0 %v326
    %v341 = vpop.f32.mrf.mxu0
    %v342 = vadd.f32 0.0, %v341
    %v343 = vpop.f32.mrf.mxu0
    %344 = vdwg.mxu0
    %v346 = vsel %vm259, %v322, 0
    %v349 = vsel %vm328, %v324, 0
    %351 = vmatpush.bf16.msra.mxu0 0
    %352 = vmatpush.bf16.msra.mxu0 0
    %353 = vmatpush.bf16.msra.mxu0 0
    %354 = vmatpush.bf16.msra.mxu0 0
    %355 = vmatpush.bf16.msra.mxu0 0
    %356 = vmatpush.bf16.msra.mxu0 0
    %357 = vmatpush.bf16.msra.mxu0 0
    %358 = vmatpush.bf16.msra.mxu0 %v349
    %359 = vmatmul.bf16.gmra.mxu0 %v346
    %v360 = vpop.f32.mrf.mxu0
    %v361 = vadd.f32 0.0, %v360
    %v362 = vpop.f32.mrf.mxu0
    %363 = vdwg.mxu0
    %v365 = vunpack.c.l.b16 %v255
    %v366 = vpack.c.b16 %v365, %v365
    %367 = vrot.lane.b32.xlu0 %v366, 120
    %v368 = vpop.permute.xlu0 %367
    %v370 = vunpack.c.l.b16 %v257
    %v371 = vpack.c.b16 %v370, %v370
    %372 = vrot.lane.b32.xlu0 %v371, 120
    %v373 = vpop.permute.xlu0 %372
    %v375 = vsel %vm259, %v368, 0
    %v378 = vsel %vm259, %v373, 0
    %380 = vmatpush.bf16.xpose.msra.mxu0 0
    %381 = vmatpush.bf16.xpose.msra.mxu0 0
    %382 = vmatpush.bf16.xpose.msra.mxu0 0
    %383 = vmatpush.bf16.xpose.msra.mxu0 0
    %384 = vmatpush.bf16.xpose.msra.mxu0 0
    %385 = vmatpush.bf16.xpose.msra.mxu0 0
    %386 = vmatpush.bf16.xpose.msra.mxu0 0
    %387 = vmatpush.bf16.xpose.msra.mxu0 %v378
    %388 = vmatmul.bf16.gmra.mxu0 %v375
    %v389 = vpop.f32.mrf.mxu0
    %v390 = vadd.f32 0.0, %v389
    %v391 = vpop.f32.mrf.mxu0
    %392 = vdwg.mxu0
    %v394 = vunpack.c.l.b16 %v256
    %v395 = vpack.c.b16 %v394, %v394
    %396 = vrot.lane.b32.xlu0 %v395, 120
    %v397 = vpop.permute.xlu0 %396
    %v399 = vunpack.c.l.b16 %v258
    %v400 = vpack.c.b16 %v399, %v399
    %401 = vrot.lane.b32.xlu0 %v400, 120
    %v402 = vpop.permute.xlu0 %401
    %v404 = vsel %vm259, %v397, 0
    %v407 = vsel %vm259, %v402, 0
    %409 = vmatpush.bf16.xpose.msra.mxu0 0
    %410 = vmatpush.bf16.xpose.msra.mxu0 0
    %411 = vmatpush.bf16.xpose.msra.mxu0 0
    %412 = vmatpush.bf16.xpose.msra.mxu0 0
    %413 = vmatpush.bf16.xpose.msra.mxu0 0
    %414 = vmatpush.bf16.xpose.msra.mxu0 0
    %415 = vmatpush.bf16.xpose.msra.mxu0 0
    %416 = vmatpush.bf16.xpose.msra.mxu0 %v407
    %417 = vmatmul.bf16.gmra.mxu0 %v404
    %v418 = vpop.f32.mrf.mxu0
    %v419 = vadd.f32 0.0, %v418
    %v420 = vpop.f32.mrf.mxu0
    %421 = vdwg.mxu0
    %v422 = vsel %vm298, %v390, -inf
    %423 = vmax.xlane.f32.xlu0 %v422
    %v424 = vpop.xlane.xlu0 %423
    %v425 = vsel %vm298, %v419, -inf
    %426 = vmax.xlane.f32.xlu0 %v425
    %v427 = vpop.xlane.xlu0 %426
    %v428 = vsub.f32 %v390, %v424
    %v429 = vsub.f32 %v419, %v427
    %v430 = vmul.f32 %v428, 1.442695
    %v431 = vpow.pop %v430
    %v432 = vmul.f32 %v429, 1.442695
    %v433 = vpow.pop %v432
    %v434 = vsel %vm298, %v431, 0.0
    %435 = vadd.xlane.f32.xlu0 %v434
    %v436 = vpop.xlane.xlu0 %435
    %v437 = vsel %vm298, %v433, 0.0
    %438 = vadd.xlane.f32.xlu0 %v437
    %v439 = vpop.xlane.xlu0 %438
    %v440 = vrcp.pop %v436
    %v441 = vrcp.pop %v439
    %v442 = vmul.f32 %v431, %v440
    %v443 = vmul.f32 %v433, %v441
    %v444 = vpack.c.bf16 %v442, %v442
    %v445 = vpack.c.bf16 %v443, %v443
    %v447 = vunpack.c.l.b16 %v323
    %v448 = vpack.c.b16 %v447, %v447
    %449 = vrot.lane.b32.xlu0 %v448, 120
    %v450 = vpop.permute.xlu0 %449
    %v452 = vsel %vm259, %v444, 0
    %v455 = vsel %vm328, %v450, 0
    %457 = vmatpush.bf16.msra.mxu0 0
    %458 = vmatpush.bf16.msra.mxu0 0
    %459 = vmatpush.bf16.msra.mxu0 0
    %460 = vmatpush.bf16.msra.mxu0 0
    %461 = vmatpush.bf16.msra.mxu0 0
    %462 = vmatpush.bf16.msra.mxu0 0
    %463 = vmatpush.bf16.msra.mxu0 0
    %464 = vmatpush.bf16.msra.mxu0 %v455
    %465 = vmatmul.bf16.gmra.mxu0 %v452
    %v466 = vpop.f32.mrf.mxu0
    %v467 = vadd.f32 0.0, %v466
    %v468 = vpop.f32.mrf.mxu0
    %469 = vdwg.mxu0
    %v471 = vunpack.c.l.b16 %v324
    %v472 = vpack.c.b16 %v471, %v471
    %473 = vrot.lane.b32.xlu0 %v472, 120
    %v474 = vpop.permute.xlu0 %473
    %v476 = vsel %vm259, %v445, 0
    %v479 = vsel %vm328, %v474, 0
    %481 = vmatpush.bf16.msra.mxu0 0
    %482 = vmatpush.bf16.msra.mxu0 0
    %483 = vmatpush.bf16.msra.mxu0 0
    %484 = vmatpush.bf16.msra.mxu0 0
    %485 = vmatpush.bf16.msra.mxu0 0
    %486 = vmatpush.bf16.msra.mxu0 0
    %487 = vmatpush.bf16.msra.mxu0 0
    %488 = vmatpush.bf16.msra.mxu0 %v479
    %489 = vmatmul.bf16.gmra.mxu0 %v476
    %v490 = vpop.f32.mrf.mxu0
    %v491 = vadd.f32 0.0, %v490
    %v492 = vpop.f32.mrf.mxu0
    %493 = vdwg.mxu0
    %494 = vrot.lane.b32.xlu0 %v366, 112
    %v495 = vpop.permute.xlu0 %494
    %496 = vrot.lane.b32.xlu0 %v371, 112
    %v497 = vpop.permute.xlu0 %496
    %v499 = vsel %vm259, %v495, 0
    %v502 = vsel %vm259, %v497, 0
    %504 = vmatpush.bf16.xpose.msra.mxu0 0
    %505 = vmatpush.bf16.xpose.msra.mxu0 0
    %506 = vmatpush.bf16.xpose.msra.mxu0 0
    %507 = vmatpush.bf16.xpose.msra.mxu0 0
    %508 = vmatpush.bf16.xpose.msra.mxu0 0
    %509 = vmatpush.bf16.xpose.msra.mxu0 0
    %510 = vmatpush.bf16.xpose.msra.mxu0 0
    %511 = vmatpush.bf16.xpose.msra.mxu0 %v502
    %512 = vmatmul.bf16.gmra.mxu0 %v499
    %v513 = vpop.f32.mrf.mxu0
    %v514 = vadd.f32 0.0, %v513
    %v515 = vpop.f32.mrf.mxu0
    %516 = vdwg.mxu0
    %517 = vrot.lane.b32.xlu0 %v395, 112
    %v518 = vpop.permute.xlu0 %517
    %519 = vrot.lane.b32.xlu0 %v400, 112
    %v520 = vpop.permute.xlu0 %519
    %v522 = vsel %vm259, %v518, 0
    %v525 = vsel %vm259, %v520, 0
    %527 = vmatpush.bf16.xpose.msra.mxu0 0
    %528 = vmatpush.bf16.xpose.msra.mxu0 0
    %529 = vmatpush.bf16.xpose.msra.mxu0 0
    %530 = vmatpush.bf16.xpose.msra.mxu0 0
    %531 = vmatpush.bf16.xpose.msra.mxu0 0
    %532 = vmatpush.bf16.xpose.msra.mxu0 0
    %533 = vmatpush.bf16.xpose.msra.mxu0 0
    %534 = vmatpush.bf16.xpose.msra.mxu0 %v525
    %535 = vmatmul.bf16.gmra.mxu0 %v522
    %v536 = vpop.f32.mrf.mxu0
    %v537 = vadd.f32 0.0, %v536
    %v538 = vpop.f32.mrf.mxu0
    %539 = vdwg.mxu0
    %v540 = vsel %vm298, %v514, -inf
    %541 = vmax.xlane.f32.xlu0 %v540
    %v542 = vpop.xlane.xlu0 %541
    %v543 = vsel %vm298, %v537, -inf
    %544 = vmax.xlane.f32.xlu0 %v543
    %v545 = vpop.xlane.xlu0 %544
    %v546 = vsub.f32 %v514, %v542
    %v547 = vsub.f32 %v537, %v545
    %v548 = vmul.f32 %v546, 1.442695
    %v549 = vpow.pop %v548
    %v550 = vmul.f32 %v547, 1.442695
    %v551 = vpow.pop %v550
    %v552 = vsel %vm298, %v549, 0.0
    %553 = vadd.xlane.f32.xlu0 %v552
    %v554 = vpop.xlane.xlu0 %553
    %v555 = vsel %vm298, %v551, 0.0
    %556 = vadd.xlane.f32.xlu0 %v555
    %v557 = vpop.xlane.xlu0 %556
    %v558 = vrcp.pop %v554
    %v559 = vrcp.pop %v557
    %v560 = vmul.f32 %v549, %v558
    %v561 = vmul.f32 %v551, %v559
    %v562 = vpack.c.bf16 %v560, %v560
    %v563 = vpack.c.bf16 %v561, %v561
    %564 = vrot.lane.b32.xlu0 %v448, 112
    %v565 = vpop.permute.xlu0 %564
    %v567 = vsel %vm259, %v562, 0
    %v570 = vsel %vm328, %v565, 0
    %572 = vmatpush.bf16.msra.mxu0 0
    %573 = vmatpush.bf16.msra.mxu0 0
    %574 = vmatpush.bf16.msra.mxu0 0
    %575 = vmatpush.bf16.msra.mxu0 0
    %576 = vmatpush.bf16.msra.mxu0 0
    %577 = vmatpush.bf16.msra.mxu0 0
    %578 = vmatpush.bf16.msra.mxu0 0
    %579 = vmatpush.bf16.msra.mxu0 %v570
    %580 = vmatmul.bf16.gmra.mxu0 %v567
    %v581 = vpop.f32.mrf.mxu0
    %v582 = vadd.f32 0.0, %v581
    %v583 = vpop.f32.mrf.mxu0
    %584 = vdwg.mxu0
    %585 = vrot.lane.b32.xlu0 %v472, 112
    %v586 = vpop.permute.xlu0 %585
    %v588 = vsel %vm259, %v563, 0
    %v591 = vsel %vm328, %v586, 0
    %593 = vmatpush.bf16.msra.mxu0 0
    %594 = vmatpush.bf16.msra.mxu0 0
    %595 = vmatpush.bf16.msra.mxu0 0
    %596 = vmatpush.bf16.msra.mxu0 0
    %597 = vmatpush.bf16.msra.mxu0 0
    %598 = vmatpush.bf16.msra.mxu0 0
    %599 = vmatpush.bf16.msra.mxu0 0
    %600 = vmatpush.bf16.msra.mxu0 %v591
    %601 = vmatmul.bf16.gmra.mxu0 %v588
    %v602 = vpop.f32.mrf.mxu0
    %v603 = vadd.f32 0.0, %v602
    %v604 = vpop.f32.mrf.mxu0
    %605 = vdwg.mxu0
    %606 = vrot.lane.b32.xlu0 %v366, 104
    %v607 = vpop.permute.xlu0 %606
    %608 = vrot.lane.b32.xlu0 %v371, 104
    %v609 = vpop.permute.xlu0 %608
    %v611 = vsel %vm259, %v607, 0
    %v614 = vsel %vm259, %v609, 0
    %616 = vmatpush.bf16.xpose.msra.mxu0 0
    %617 = vmatpush.bf16.xpose.msra.mxu0 0
    %618 = vmatpush.bf16.xpose.msra.mxu0 0
    %619 = vmatpush.bf16.xpose.msra.mxu0 0
    %620 = vmatpush.bf16.xpose.msra.mxu0 0
    %621 = vmatpush.bf16.xpose.msra.mxu0 0
    %622 = vmatpush.bf16.xpose.msra.mxu0 0
    %623 = vmatpush.bf16.xpose.msra.mxu0 %v614
    %624 = vmatmul.bf16.gmra.mxu0 %v611
    %v625 = vpop.f32.mrf.mxu0
    %v626 = vadd.f32 0.0, %v625
    %v627 = vpop.f32.mrf.mxu0
    %628 = vdwg.mxu0
    %629 = vrot.lane.b32.xlu0 %v395, 104
    %v630 = vpop.permute.xlu0 %629
    %631 = vrot.lane.b32.xlu0 %v400, 104
    %v632 = vpop.permute.xlu0 %631
    %v634 = vsel %vm259, %v630, 0
    %v637 = vsel %vm259, %v632, 0
    %639 = vmatpush.bf16.xpose.msra.mxu0 0
    %640 = vmatpush.bf16.xpose.msra.mxu0 0
    %641 = vmatpush.bf16.xpose.msra.mxu0 0
    %642 = vmatpush.bf16.xpose.msra.mxu0 0
    %643 = vmatpush.bf16.xpose.msra.mxu0 0
    %644 = vmatpush.bf16.xpose.msra.mxu0 0
    %645 = vmatpush.bf16.xpose.msra.mxu0 0
    %646 = vmatpush.bf16.xpose.msra.mxu0 %v637
    %647 = vmatmul.bf16.gmra.mxu0 %v634
    %v648 = vpop.f32.mrf.mxu0
    %v649 = vadd.f32 0.0, %v648
    %v650 = vpop.f32.mrf.mxu0
    %651 = vdwg.mxu0
    %v652 = vsel %vm298, %v626, -inf
    %653 = vmax.xlane.f32.xlu0 %v652
    %v654 = vpop.xlane.xlu0 %653
    %v655 = vsel %vm298, %v649, -inf
    %656 = vmax.xlane.f32.xlu0 %v655
    %v657 = vpop.xlane.xlu0 %656
    %v658 = vsub.f32 %v626, %v654
    %v659 = vsub.f32 %v649, %v657
    %v660 = vmul.f32 %v658, 1.442695
    %v661 = vpow.pop %v660
    %v662 = vmul.f32 %v659, 1.442695
    %v663 = vpow.pop %v662
    %v664 = vsel %vm298, %v661, 0.0
    %665 = vadd.xlane.f32.xlu0 %v664
    %v666 = vpop.xlane.xlu0 %665
    %v667 = vsel %vm298, %v663, 0.0
    %668 = vadd.xlane.f32.xlu0 %v667
    %v669 = vpop.xlane.xlu0 %668
    %v670 = vrcp.pop %v666
    %v671 = vrcp.pop %v669
    %v672 = vmul.f32 %v661, %v670
    %v673 = vmul.f32 %v663, %v671
    %v674 = vpack.c.bf16 %v672, %v672
    %v675 = vpack.c.bf16 %v673, %v673
    %676 = vrot.lane.b32.xlu0 %v448, 104
    %v677 = vpop.permute.xlu0 %676
    %v679 = vsel %vm259, %v674, 0
    %v682 = vsel %vm328, %v677, 0
    %684 = vmatpush.bf16.msra.mxu0 0
    %685 = vmatpush.bf16.msra.mxu0 0
    %686 = vmatpush.bf16.msra.mxu0 0
    %687 = vmatpush.bf16.msra.mxu0 0
    %688 = vmatpush.bf16.msra.mxu0 0
    %689 = vmatpush.bf16.msra.mxu0 0
    %690 = vmatpush.bf16.msra.mxu0 0
    %691 = vmatpush.bf16.msra.mxu0 %v682
    %692 = vmatmul.bf16.gmra.mxu0 %v679
    %v693 = vpop.f32.mrf.mxu0
    %v694 = vadd.f32 0.0, %v693
    %v695 = vpop.f32.mrf.mxu0
    %696 = vdwg.mxu0
    %697 = vrot.lane.b32.xlu0 %v472, 104
    %v698 = vpop.permute.xlu0 %697
    %v700 = vsel %vm259, %v675, 0
    %v703 = vsel %vm328, %v698, 0
    %705 = vmatpush.bf16.msra.mxu0 0
    %706 = vmatpush.bf16.msra.mxu0 0
    %707 = vmatpush.bf16.msra.mxu0 0
    %708 = vmatpush.bf16.msra.mxu0 0
    %709 = vmatpush.bf16.msra.mxu0 0
    %710 = vmatpush.bf16.msra.mxu0 0
    %711 = vmatpush.bf16.msra.mxu0 0
    %712 = vmatpush.bf16.msra.mxu0 %v703
    %713 = vmatmul.bf16.gmra.mxu0 %v700
    %v714 = vpop.f32.mrf.mxu0
    %v715 = vadd.f32 0.0, %v714
    %v716 = vpop.f32.mrf.mxu0
    %717 = vdwg.mxu0
    %720 = vrot.lane.b32.xlu0 %v467, 8
    %v721 = vpop.permute.xlu0 %720
    %722 = vrot.lane.b32.xlu0 %v491, 8
    %v723 = vpop.permute.xlu0 %722
    %728 = vrot.lane.b32.xlu0 %v582, 16
    %v729 = vpop.permute.xlu0 %728
    %730 = vrot.lane.b32.xlu0 %v603, 16
    %v731 = vpop.permute.xlu0 %730
    %736 = vrot.lane.b32.xlu0 %v694, 24
    %v737 = vpop.permute.xlu0 %736
    %738 = vrot.lane.b32.xlu0 %v715, 24
    %v739 = vpop.permute.xlu0 %738
    %v742 = vsel %vm259, %v342, %v721
    %v743 = vsel %vm259, %v361, %v723
    %vm744 = vcmask 130048
    %v745 = vsel %vm744, %v742, %v729
    %v746 = vsel %vm744, %v743, %v731
    %vm747 = vcmask 195584
    %v748 = vsel %vm747, %v745, %v737
    %v749 = vsel %vm747, %v746, %v739
    %v750 = vpack.c.bf16 %v748, %v748
    %v751 = vpack.c.bf16 %v749, %v749
    %v752 = vld [vmem:[#allocation7] sm:$0xf]
    %v753 = vld [vmem:[#allocation7 + $0x4] sm:$0xf]
    %v754 = vld [vmem:[#allocation7 + $0x8] sm:$0xf]
    %v755 = vld [vmem:[#allocation7 + $0xc] sm:$0xf]
    %v756 = vld [vmem:[%s9] sm:$0x1]
    %v758 = vperm.slane %v756, 0
    %v762 = vunpack.c.l.b16 %v750
    %v763 = vunpack.c.l.b16 %v751
    %v764 = vrot.slane %v763, 7
    %v765 = vsel %vm144, %v764, %v762
    %v766 = vpack.c.b16 %v765, %v765
    %v771 = vunpack.c.l.b16 %v752
    %v772 = vunpack.c.l.b16 %v753
    %v773 = vunpack.c.l.b16 %v754
    %v774 = vunpack.c.l.b16 %v755
    %v775 = vpack.c.b16 %v772, %v771
    %v776 = vpack.c.b16 %v774, %v773
    %v780 = vsel %vm159, %v766, 0
    %782 = vmatpush.bf16.msra.mxu0 0
    %783 = vmatpush.bf16.msra.mxu0 0
    %784 = vmatpush.bf16.msra.mxu0 0
    %785 = vmatpush.bf16.msra.mxu0 0
    %786 = vmatpush.bf16.msra.mxu0 0
    %787 = vmatpush.bf16.msra.mxu0 0
    %788 = vmatpush.bf16.msra.mxu0 %v776
    %789 = vmatpush.bf16.msra.mxu0 %v775
    %790 = vmatmul.bf16.gmra.mxu0 %v780
    %v791 = vpop.f32.mrf.mxu0
    %v792 = vadd.f32 %v758, %v791
    %v793 = vpop.f32.mrf.mxu0
    %794 = vdwg.mxu0
    %v797 = vrot.slane %v124, 7
    %v798 = vrot.slane %v125, 6
    %v799 = vsel %vm144, %v798, %v797
    %v801 = vadd.f32 %v792, %v799
    %v802 = vld [vmem:[%s10] sm:$0x1]
    %v803 = vld [vmem:[%s11] sm:$0x1]
    %vm804 = vcmask 254976
    %v805 = vsel %vm804, %v801, 0.0
    %806 = vadd.xlane.f32.xlu0 %v805
    %v807 = vpop.xlane.xlu0 %806
    %v808 = vrcp.pop 32.0
    %v809 = vmul.f32 32.0, %v808
    %v810 = vsub.f32 1.0, %v809
    %v811 = vmul.f32 %v808, %v810
    %v812 = vadd.f32 %v808, %v811
    %vm813 = vweird.f32 %v808
    %v814 = vsel %vm813, %v808, %v812
    %v815 = vmul.f32 %v807, %v814
    %v816 = vsub.f32 %v801, %v815
    %v817 = vmul.f32 %v816, %v816
    %v818 = vsel %vm804, %v817, 0.0
    %819 = vadd.xlane.f32.xlu0 %v818
    %v820 = vpop.xlane.xlu0 %819
    %v821 = vmul.f32 %v820, %v814
    %v822 = vadd.f32 %v821, 1e-05
    %v823 = vrsqrt.pop %v822
    %v824 = vmul.f32 %v823, %v822
    %v825 = vmul.f32 %v824, %v823
    %v826 = vmul.f32 0.5, %v825
    %v827 = vsub.f32 1.5, %v826
    %v828 = vmul.f32 %v823, %v827
    %vm829 = vweird.f32 %v822
    %vm830 = vweird.f32 %v823
    %vm831 = vmor %vm829, %vm830
    %v832 = vsel %vm831, %v823, %v828
    %v833 = vmul.f32 %v816, %v832
    %v835 = vperm.slane %v802, 0
    %v837 = vmul.f32 %v833, %v835
    %v839 = vperm.slane %v803, 0
    %v841 = vadd.f32 %v837, %v839
    %v842 = vpack.c.bf16 %v841, %v841
    %v843 = vld [vmem:[#allocation8] sm:$0xf]
    %v844 = vld [vmem:[#allocation8 + $0x4] sm:$0xf]
    %v845 = vld [vmem:[#allocation8 + $0x8] sm:$0xf]
    %v846 = vld [vmem:[#allocation8 + $0xc] sm:$0xf]
    %v847 = vld [vmem:[%s13] sm:$0x1]
    %v849 = vperm.slane %v847, 0
    %v855 = vunpack.c.l.b16 %v843
    %v856 = vunpack.c.l.b16 %v844
    %v857 = vunpack.c.l.b16 %v845
    %v858 = vunpack.c.l.b16 %v846
    %v859 = vpack.c.b16 %v856, %v855
    %v860 = vpack.c.b16 %v858, %v857
    %v864 = vsel %vm159, %v842, 0
    %866 = vmatpush.bf16.msra.mxu0 0
    %867 = vmatpush.bf16.msra.mxu0 0
    %868 = vmatpush.bf16.msra.mxu0 0
    %869 = vmatpush.bf16.msra.mxu0 0
    %870 = vmatpush.bf16.msra.mxu0 0
    %871 = vmatpush.bf16.msra.mxu0 0
    %872 = vmatpush.bf16.msra.mxu0 %v860
    %873 = vmatpush.bf16.msra.mxu0 %v859
    %874 = vmatmul.bf16.gmra.mxu0 %v864
    %v875 = vpop.f32.mrf.mxu0
    %v876 = vadd.f32 %v849, %v875
    %v877 = vpop.f32.mrf.mxu0
    %878 = vdwg.mxu0
    %v879 = vmax.f32 %v876, 0.0
    %v880 = vpack.c.bf16 %v879, %v879
    %v881 = vld [vmem:[%s14] sm:$0xf]
    %v882 = vld [vmem:[%s14 + $0x4] sm:$0xf]
    %v883 = vld [vmem:[%s14 + $0x8] sm:$0xf]
    %v884 = vld [vmem:[%s14 + $0xc] sm:$0xf]
    %v885 = vld [vmem:[%s14 + $0x10] sm:$0xf]
    %v886 = vld [vmem:[%s14 + $0x14] sm:$0xf]
    %v887 = vld [vmem:[%s14 + $0x18] sm:$0xf]
    %v888 = vld [vmem:[%s14 + $0x1c] sm:$0xf]
    %v889 = vld [vmem:[%s15] sm:$0x1]
    %v891 = vperm.slane %v889, 0
    %v901 = vunpack.c.l.b16 %v881
    %v902 = vunpack.c.l.b16 %v882
    %v903 = vunpack.c.l.b16 %v883
    %v904 = vunpack.c.l.b16 %v884
    %v905 = vunpack.c.l.b16 %v885
    %v906 = vunpack.c.l.b16 %v886
    %v907 = vunpack.c.l.b16 %v887
    %v908 = vunpack.c.l.b16 %v888
    %v909 = vpack.c.b16 %v902, %v901
    %v910 = vpack.c.b16 %v904, %v903
    %v911 = vpack.c.b16 %v906, %v905
    %v912 = vpack.c.b16 %v908, %v907
    %vm917 = vcmask 523264
    %v919 = vsel %vm917, %v880, 0
    %921 = vmatpush.bf16.msra.mxu0 0
    %922 = vmatpush.bf16.msra.mxu0 0
    %923 = vmatpush.bf16.msra.mxu0 0
    %924 = vmatpush.bf16.msra.mxu0 0
    %925 = vmatpush.bf16.msra.mxu0 %v912
    %926 = vmatpush.bf16.msra.mxu0 %v911
    %927 = vmatpush.bf16.msra.mxu0 %v910
    %928 = vmatpush.bf16.msra.mxu0 %v909
    %929 = vmatmul.bf16.gmra.mxu0 %v919
    %v930 = vpop.f32.mrf.mxu0
    %v931 = vadd.f32 %v891, %v930
    %v932 = vpop.f32.mrf.mxu0
    %933 = vdwg.mxu0
    %v934 = vadd.f32 %v931, %v841
    %v935 = vld [vmem:[%s16] sm:$0x1]
    %v936 = vld [vmem:[%s17] sm:$0x1]
    %v937 = vsel %vm804, %v934, 0.0
    %938 = vadd.xlane.f32.xlu0 %v937
    %v939 = vpop.xlane.xlu0 %938
    %v940 = vmul.f32 %v939, %v814
    %v941 = vsub.f32 %v934, %v940
    %v942 = vmul.f32 %v941, %v941
    %v943 = vsel %vm804, %v942, 0.0
    %944 = vadd.xlane.f32.xlu0 %v943
    %v945 = vpop.xlane.xlu0 %944
    %v946 = vmul.f32 %v945, %v814
    %v947 = vadd.f32 %v946, 1e-05
    %v948 = vrsqrt.pop %v947
    %v949 = vmul.f32 %v948, %v947
    %v950 = vmul.f32 %v949, %v948
    %v951 = vmul.f32 0.5, %v950
    %v952 = vsub.f32 1.5, %v951
    %v953 = vmul.f32 %v948, %v952
    %vm954 = vweird.f32 %v947
    %vm955 = vweird.f32 %v948
    %vm956 = vmor %vm954, %vm955
    %v957 = vsel %vm956, %v948, %v953
    %v958 = vmul.f32 %v941, %v957
    %v960 = vperm.slane %v935, 0
    %v962 = vmul.f32 %v958, %v960
    %v964 = vperm.slane %v936, 0
    %v966 = vadd.f32 %v962, %v964
    %v968 = vrot.slane %v966, 1
    %vm970 = vcmask 253952
    %971 = vst.msk [vmem:[#allocation10] sm:$0x1] %vm970, %v966
    %972 = vst.msk [vmem:[#allocation10 + $0x1] sm:$0x1] %vm970, %v968
    // Predicated region
    $region90: #{tpu_custom_call.1} parent=1 // pred_check
      _
    $region91: #{tpu_custom_call.1} parent=1 // pred_check_branch
      %974 = sbr.rel (0) target = $region93
    $region92: #{tpu_custom_call.1} parent=1 // pred_region
      %976 = vsyncadd [#allocation4], 0
      %s977 = sshll.u32 [#allocation10], 4
      %s978 = int_to_ptr.vmem [resolvable:$true] %s977
      %s979 = sshll.u32 %s18, 4
      %s980 = int_to_ptr.hbm [resolvable:$true] %s979
      %985 = dma.vmem_to_hbm [thread:$0]  %s978, 32, %s980, [#allocation4], 16, 16, 1
    $region93: #{tpu_custom_call.1} parent=1 // pred_fallthru
      _
    // Predicated region
    $region94: #{tpu_custom_call.1} parent=1 // pred_check
      _
    $region95: #{tpu_custom_call.1} parent=1 // pred_check_branch
      %987 = sbr.rel (0) target = $region97
    $region96: #{tpu_custom_call.1} parent=1 // pred_region
      %989 = dma.done [#allocation4], 32
    $region97: #{tpu_custom_call.1} parent=1 // pred_fallthru
      _
    %990 = vsyncpa [#allocation3], 1
    %991 = vsyncpa [#allocation6], 1
    %992 = vsyncpa [#allocation9], 1
    %993 = vsyncpa [#allocation4], 1

</llo_original>
